<compile_context>
chip_gen: v7x
topology: tpu7x:2x2x1
jax: 0.10.0
libtpu: 0.0.40
codegen_flags: <defaults>
</compile_context>

<pallas_src>
import jax
import jax.numpy as jnp
from jax.experimental import pallas as pl
from jax.experimental.pallas import tpu as pltpu

IN_DIM = 100
IN_PAD = 128      # padded contraction dim of the first layer
H1_DIM = 256
H2_DIM = 512
OUT_DIM = 784     # real output width (stored to HBM)
OUT_PAD = 896     # 7 * 128, lane-dense width of the last matmul


def generator_kernel(x_ref, w1_ref, b1_ref, w2_ref, b2_ref, w3_ref, b3_ref, o_ref):
    # x tile: (TM, 128) bf16 (K zero-padded); weights bf16; biases f32.
    # Each matmul accumulates in f32 on the MXU; ReLU runs in f32 then repacks
    # to bf16 for the next matmul.  The last matmul is 896 wide (lane-dense);
    # only the real 784 columns go through tanh (f32, v5e-safe) and are stored
    # as bf16 into the lane-tight output tile.
    x = x_ref[...]
    h1 = jnp.dot(x, w1_ref[...], preferred_element_type=jnp.float32) + b1_ref[...]
    h1 = jnp.maximum(h1, 0.0).astype(jnp.bfloat16)
    h2 = jnp.dot(h1, w2_ref[...], preferred_element_type=jnp.float32) + b2_ref[...]
    h2 = jnp.maximum(h2, 0.0).astype(jnp.bfloat16)
    h3 = jnp.dot(h2, w3_ref[...], preferred_element_type=jnp.float32) + b3_ref[...]
    o_ref[...] = jnp.tanh(h3[:, :OUT_DIM]).astype(o_ref.dtype)


def _choose_tm(B):
    """Pick the batch-tile rows.

    * Target 256 rows (big tiles amortize per-grid-step overhead and recover
      most of the HBM roofline).
    * Keep >= 2 grid steps whenever the batch allows so v7x's two TensorCores
      both get work via the "parallel" batch axis.
    * Round to the bf16 sublane-packing granule (16 rows).
    """
    if B >= 512:
        return 256
    if B <= 16:
        return 16
    half = (B + 1) // 2
    return min(256, ((half + 15) // 16) * 16)


def prepare_params(params):
    """One-time conversion of f32 torch-style params to the kernel layout.

    Hoisted out of the forward path: bf16 casts, K-padding of w1 (100->128) and
    N-padding of w3/b3 (784->896).  Biases stay f32.
    """
    w1, b1, w2, b2, w3, b3 = params
    w1p = jnp.pad(w1, ((0, IN_PAD - IN_DIM), (0, 0))).astype(jnp.bfloat16)
    w2b = w2.astype(jnp.bfloat16)
    w3p = jnp.pad(w3, ((0, 0), (0, OUT_PAD - OUT_DIM))).astype(jnp.bfloat16)
    b3p = jnp.pad(b3, ((0, 0), (0, OUT_PAD - OUT_DIM)))
    return (w1p, b1, w2b, b2, w3p, b3p)


def generator_forward(x, prepared_params):
    """x: (B, 100) float32 -> (B, 28, 28) bfloat16 image in [-1, 1].

    Output is bf16 (tanh range is [-1, 1], ample precision for generator
    images); upcast in the caller only if a downstream consumer needs f32.
    """
    w1p, b1, w2b, b2, w3p, b3p = prepared_params
    B = x.shape[0]

    TM = _choose_tm(B)
    B_pad = ((B + TM - 1) // TM) * TM
    grid = (B_pad // TM,)

    # bf16 cast + zero-pad of the latent input (rows to B_pad, cols 100 -> 128).
    xb = jnp.pad(x.astype(jnp.bfloat16), ((0, B_pad - B), (0, IN_PAD - IN_DIM)))

    def const_spec(shape):
        # Weight / bias blocks: full array, same block every grid step ->
        # DMA'd once, VMEM-resident across the whole grid.
        return pl.BlockSpec(shape, lambda i: (0, 0))

    out = pl.pallas_call(
        generator_kernel,
        out_shape=jax.ShapeDtypeStruct((B_pad, OUT_DIM), jnp.bfloat16),
        grid=grid,
        in_specs=[
            pl.BlockSpec((TM, IN_PAD), lambda i: (i, 0)),   # x tiles stream
            const_spec(w1p.shape), const_spec(b1.shape),
            const_spec(w2b.shape), const_spec(b2.shape),
            const_spec(w3p.shape), const_spec(b3p.shape),
        ],
        out_specs=pl.BlockSpec((TM, OUT_DIM), lambda i: (i, 0)),
        compiler_params=pltpu.CompilerParams(
            dimension_semantics=("parallel",),
        ),
    )(xb, w1p, b1, w2b, b2, w3p, b3p)

    return out[:B].reshape(B, 28, 28)


def init_params(key):
    """Deterministic init matching torch.nn.Linear shapes (uniform +-1/sqrt(fan_in)).

    Weights are stored as (in_features, out_features) so the kernel computes
    x @ W + b (equivalent to PyTorch's x @ W.T with its (out, in) layout).
    """
    dims = [(IN_DIM, H1_DIM), (H1_DIM, H2_DIM), (H2_DIM, OUT_DIM)]
    params = []
    for (fan_in, fan_out) in dims:
        key, kw, kb = jax.random.split(key, 3)
        bound = 1.0 / jnp.sqrt(jnp.float32(fan_in))
        w = jax.random.uniform(kw, (fan_in, fan_out), jnp.float32, -bound, bound)
        b = jax.random.uniform(kb, (1, fan_out), jnp.float32, -bound, bound)
        params += [w, b]
    return tuple(params)


if __name__ == "__main__":
    key = jax.random.PRNGKey(0)
    k_params, k_x = jax.random.split(key)

    params = init_params(k_params)
    prepared = prepare_params(params)

    B = 8
    x = jax.random.normal(k_x, (B, IN_DIM), jnp.float32)  # latent noise vectors

    img = generator_forward(x, prepared)
    img = jax.block_until_ready(img)

    # sanity checks on shape / value range (tanh output in [-1, 1])
    assert img.shape == (B, 28, 28)
    assert img.dtype == jnp.bfloat16
    img_f32 = img.astype(jnp.float32)
    assert bool(jnp.all(jnp.isfinite(img_f32)))
    assert float(jnp.max(jnp.abs(img_f32))) <= 1.0 + 1e-6

    # cross-check against a plain-JAX reference using the same bf16 weight /
    # activation quantization with f32 accumulation (should match tightly,
    # difference limited to the final bf16 output cast + accumulation order)
    w1, b1, w2, b2, w3, b3 = params
    xb = x.astype(jnp.bfloat16)
    w1b, w2b, w3b = (w.astype(jnp.bfloat16) for w in (w1, w2, w3))
    h1 = jnp.maximum(jnp.dot(xb, w1b, preferred_element_type=jnp.float32) + b1, 0.0)
    h1 = h1.astype(jnp.bfloat16)
    h2 = jnp.maximum(jnp.dot(h1, w2b, preferred_element_type=jnp.float32) + b2, 0.0)
    h2 = h2.astype(jnp.bfloat16)
    ref = jnp.tanh(jnp.dot(h2, w3b, preferred_element_type=jnp.float32) + b3)
    ref = ref.reshape(B, 28, 28)
    assert bool(jnp.allclose(img_f32, ref, atol=1e-2, rtol=1e-2))

    # and loosely against the full-f32 math (semantics preserved under bf16 cast)
    h1f = jnp.maximum(x @ w1 + b1, 0.0)
    h2f = jnp.maximum(h1f @ w2 + b2, 0.0)
    ref_f32 = jnp.tanh(h2f @ w3 + b3).reshape(B, 28, 28)
    assert bool(jnp.allclose(img_f32, ref_f32, atol=4e-2, rtol=4e-2))

    print("KERNEL_OK")
</pallas_src>

<mosaic_0001>
module attributes {stable_mosaic.version = 11 : i64} {
  func.func @generator_kernel(%arg0: i32, %arg1: memref<16x128xbf16, #tpu.memory_space<vmem>>, %arg2: memref<128x256xbf16, #tpu.memory_space<vmem>>, %arg3: memref<1x256xf32, #tpu.memory_space<vmem>>, %arg4: memref<256x512xbf16, #tpu.memory_space<vmem>>, %arg5: memref<1x512xf32, #tpu.memory_space<vmem>>, %arg6: memref<512x896xbf16, #tpu.memory_space<vmem>>, %arg7: memref<1x896xf32, #tpu.memory_space<vmem>>, %arg8: memref<16x784xbf16, #tpu.memory_space<vmem>>) attributes {dimension_semantics = [#tpu.dimension_semantics<parallel>], iteration_bounds = array<i64: 1>, scalar_prefetch = 0 : i64, scratch_operands = 0 : i64, tpu.core_type = #tpu.core_type<tc>, window_params = [{transform_indices = @transform_0, window_bounds = array<i64: 16, 128>}, {pipeline_mode = #tpu.pipeline_mode<synchronous>, transform_indices = @transform_1, window_bounds = array<i64: 128, 256>}, {pipeline_mode = #tpu.pipeline_mode<synchronous>, transform_indices = @transform_2, window_bounds = array<i64: 1, 256>}, {pipeline_mode = #tpu.pipeline_mode<synchronous>, transform_indices = @transform_3, window_bounds = array<i64: 256, 512>}, {pipeline_mode = #tpu.pipeline_mode<synchronous>, transform_indices = @transform_4, window_bounds = array<i64: 1, 512>}, {pipeline_mode = #tpu.pipeline_mode<synchronous>, transform_indices = @transform_5, window_bounds = array<i64: 512, 896>}, {pipeline_mode = #tpu.pipeline_mode<synchronous>, transform_indices = @transform_6, window_bounds = array<i64: 1, 896>}, {transform_indices = @transform_7, window_bounds = array<i64: 16, 784>}]} {
    %c0 = arith.constant 0 : index
    %c0_0 = arith.constant 0 : index
    %0 = vector.load %arg1[%c0, %c0_0] : memref<16x128xbf16, #tpu.memory_space<vmem>>, vector<16x128xbf16>
    %c0_1 = arith.constant 0 : index
    %c0_2 = arith.constant 0 : index
    %1 = vector.load %arg2[%c0_1, %c0_2] : memref<128x256xbf16, #tpu.memory_space<vmem>>, vector<128x256xbf16>
    %cst = arith.constant dense<0.000000e+00> : vector<16x256xf32>
    %2 = tpu.matmul %0, %1, %cst {dimension_numbers = #tpu.dot_dimension_numbers<[1], [0], [0], [1], [0, 0, 1, 1], [], []>} : vector<16x128xbf16>, vector<128x256xbf16>, vector<16x256xf32> -> vector<16x256xf32>
    %c0_3 = arith.constant 0 : index
    %c0_4 = arith.constant 0 : index
    %3 = vector.load %arg3[%c0_3, %c0_4] : memref<1x256xf32, #tpu.memory_space<vmem>>, vector<1x256xf32>
    %4 = vector.broadcast %3 : vector<1x256xf32> to vector<16x256xf32>
    %5 = arith.addf %2, %4 : vector<16x256xf32>
    %cst_5 = arith.constant 0.000000e+00 : f32
    %6 = vector.broadcast %cst_5 : f32 to vector<16x256xf32>
    %7 = arith.maximumf %5, %6 : vector<16x256xf32>
    %8 = arith.truncf %7 : vector<16x256xf32> to vector<16x256xbf16>
    %c0_6 = arith.constant 0 : index
    %c0_7 = arith.constant 0 : index
    %9 = vector.load %arg4[%c0_6, %c0_7] : memref<256x512xbf16, #tpu.memory_space<vmem>>, vector<256x512xbf16>
    %cst_8 = arith.constant dense<0.000000e+00> : vector<16x512xf32>
    %10 = tpu.matmul %8, %9, %cst_8 {dimension_numbers = #tpu.dot_dimension_numbers<[1], [0], [0], [1], [0, 0, 1, 1], [], []>} : vector<16x256xbf16>, vector<256x512xbf16>, vector<16x512xf32> -> vector<16x512xf32>
    %c0_9 = arith.constant 0 : index
    %c0_10 = arith.constant 0 : index
    %11 = vector.load %arg5[%c0_9, %c0_10] : memref<1x512xf32, #tpu.memory_space<vmem>>, vector<1x512xf32>
    %12 = vector.broadcast %11 : vector<1x512xf32> to vector<16x512xf32>
    %13 = arith.addf %10, %12 : vector<16x512xf32>
    %cst_11 = arith.constant 0.000000e+00 : f32
    %14 = vector.broadcast %cst_11 : f32 to vector<16x512xf32>
    %15 = arith.maximumf %13, %14 : vector<16x512xf32>
    %16 = arith.truncf %15 : vector<16x512xf32> to vector<16x512xbf16>
    %c0_12 = arith.constant 0 : index
    %c0_13 = arith.constant 0 : index
    %17 = vector.load %arg6[%c0_12, %c0_13] : memref<512x896xbf16, #tpu.memory_space<vmem>>, vector<512x896xbf16>
    %cst_14 = arith.constant dense<0.000000e+00> : vector<16x896xf32>
    %18 = tpu.matmul %16, %17, %cst_14 {dimension_numbers = #tpu.dot_dimension_numbers<[1], [0], [0], [1], [0, 0, 1, 1], [], []>} : vector<16x512xbf16>, vector<512x896xbf16>, vector<16x896xf32> -> vector<16x896xf32>
    %c0_15 = arith.constant 0 : index
    %c0_16 = arith.constant 0 : index
    %19 = vector.load %arg7[%c0_15, %c0_16] : memref<1x896xf32, #tpu.memory_space<vmem>>, vector<1x896xf32>
    %20 = vector.broadcast %19 : vector<1x896xf32> to vector<16x896xf32>
    %21 = arith.addf %18, %20 : vector<16x896xf32>
    %22 = vector.extract_strided_slice %21 {offsets = [0, 0], sizes = [16, 784], strides = [1, 1]} : vector<16x896xf32> to vector<16x784xf32>
    %23 = math.tanh %22 : vector<16x784xf32>
    %24 = arith.truncf %23 : vector<16x784xf32> to vector<16x784xbf16>
    %c0_17 = arith.constant 0 : index
    %c0_18 = arith.constant 0 : index
    %25 = vector.load %arg8[%c0_17, %c0_18] : memref<16x784xbf16, #tpu.memory_space<vmem>>, vector<16x784xbf16>
    tpu.vector_store %arg8[%c0_17, %c0_18], %24 {strides = array<i32>} : memref<16x784xbf16, #tpu.memory_space<vmem>>, vector<16x784xbf16>,
    return
  }
  func.func @transform_0(%arg0: i32) -> (i32, i32) {
    %c0_i32 = arith.constant 0 : i32
    %c0_i32_0 = arith.constant 0 : i32
    return %arg0, %c0_i32 : i32, i32
  }
  func.func @transform_1(%arg0: i32) -> (i32, i32) {
    %c0_i32 = arith.constant 0 : i32
    %c0_i32_0 = arith.constant 0 : i32
    %c0_i32_1 = arith.constant 0 : i32
    return %c0_i32, %c0_i32_0 : i32, i32
  }
  func.func @transform_2(%arg0: i32) -> (i32, i32) {
    %c0_i32 = arith.constant 0 : i32
    %c0_i32_0 = arith.constant 0 : i32
    %c0_i32_1 = arith.constant 0 : i32
    return %c0_i32, %c0_i32_0 : i32, i32
  }
  func.func @transform_3(%arg0: i32) -> (i32, i32) {
    %c0_i32 = arith.constant 0 : i32
    %c0_i32_0 = arith.constant 0 : i32
    %c0_i32_1 = arith.constant 0 : i32
    return %c0_i32, %c0_i32_0 : i32, i32
  }
  func.func @transform_4(%arg0: i32) -> (i32, i32) {
    %c0_i32 = arith.constant 0 : i32
    %c0_i32_0 = arith.constant 0 : i32
    %c0_i32_1 = arith.constant 0 : i32
    return %c0_i32, %c0_i32_0 : i32, i32
  }
  func.func @transform_5(%arg0: i32) -> (i32, i32) {
    %c0_i32 = arith.constant 0 : i32
    %c0_i32_0 = arith.constant 0 : i32
    %c0_i32_1 = arith.constant 0 : i32
    return %c0_i32, %c0_i32_0 : i32, i32
  }
  func.func @transform_6(%arg0: i32) -> (i32, i32) {
    %c0_i32 = arith.constant 0 : i32
    %c0_i32_0 = arith.constant 0 : i32
    %c0_i32_1 = arith.constant 0 : i32
    return %c0_i32, %c0_i32_0 : i32, i32
  }
  func.func @transform_7(%arg0: i32) -> (i32, i32) {
    %c0_i32 = arith.constant 0 : i32
    %c0_i32_0 = arith.constant 0 : i32
    return %arg0, %c0_i32 : i32, i32
  }
}

</mosaic_0001>

<llo_original>
// kernel: tpu_custom_call.1
$region0: #{tpu_custom_call.1}
  #allocation0 [shape = 'u32[]', space=smem, size = 0x4, offset = 0x4, fixed_abs, tag = 'smem constant byte address 0x4 - core index']
  #allocation1 [shape = 'u32[144,128]{1,0:T(1,128)}', space=vmem, size = 0x12000, scoped, tag = 'internal scratch']
  %s0 = inlined_call_operand.hbm [shape: bf16[16,128], index: 0, kind: input, shape index: {}]
  %s1 = inlined_call_operand.hbm [shape: bf16[128,256], index: 1, kind: input, shape index: {}]
  %s2 = inlined_call_operand.vmem [shape: f32[1,256], index: 2, kind: input, shape index: {}]
  %s3 = inlined_call_operand.hbm [shape: bf16[256,512], index: 3, kind: input, shape index: {}]
  %s4 = inlined_call_operand.vmem [shape: f32[1,512], index: 4, kind: input, shape index: {}]
  %s5 = inlined_call_operand.hbm [shape: bf16[512,896], index: 5, kind: input, shape index: {}]
  %s6 = inlined_call_operand.vmem [shape: f32[1,896], index: 6, kind: input, shape index: {}]
  %s7 = inlined_call_operand.hbm [shape: bf16[16,784], index: 7, kind: output, shape index: {}]
  %s8 = sld [smem:[#allocation0]]
  $region54: #{tpu_custom_call.1} parent=0
    _
  %s10 = ssub.s32 1, %s8
  %s11 = scalar_select 0, %s10, %s8
  $region1: #{tpu_custom_call.1} parent=0
    #allocation2 [shape = 'u8[4096]{0}', space=vmem, size = 0x1000, scoped, tag = 'input window, operand 0, single buffered']
    #allocation3 [shape = 's32[1]{0}', space=sflag, size = 0x4, scoped, tag = 'scoped memory for tpu_custom_call.1']
    #allocation4 [shape = 's32[1]{0}', space=sflag, size = 0x4, scoped, tag = 'scoped memory for tpu_custom_call.1']
    #allocation5 [shape = 'u8[65536]{0}', space=vmem, size = 0x10000, scoped, tag = 'input window, operand 1, single buffered']
    #allocation6 [shape = 's32[1]{0}', space=sflag, size = 0x4, scoped, tag = 'scoped memory for tpu_custom_call.1']
    #allocation7 [shape = 'u8[262144]{0}', space=vmem, size = 0x40000, scoped, tag = 'input window, operand 3, single buffered']
    #allocation8 [shape = 'u8[917504]{0}', space=vmem, size = 0xe0000, scoped, tag = 'input window, operand 5, single buffered']
    #allocation9 [shape = 's32[1]{0}', space=sflag, size = 0x4, scoped, tag = 'scoped memory for tpu_custom_call.1']
    #allocation10 [shape = 'u8[28672]{0}', space=vmem, size = 0x7000, scoped, tag = 'output window, operand 0, single buffered']
    %12 = vsyncpa [#allocation3], 0
    %13 = vsyncpa [#allocation6], 0
    %14 = vsyncpa [#allocation9], 0
    %15 = vsyncpa [#allocation4], 0
    // Predicated region
    $region2: #{tpu_custom_call.1} parent=1 // pred_check
      _
    $region3: #{tpu_custom_call.1} parent=1 // pred_check_branch
      %17 = sbr.rel (0) target = $region5
    $region4: #{tpu_custom_call.1} parent=1 // pred_region
      %s19 = ssub.s32 128, 128
      %20 = vsyncadd [#allocation3], %s19
      %s21 = sshll.u32 [#allocation2], 4
      %s22 = int_to_ptr.vmem [resolvable:$true] %s21
      %27 = dma.hbm_to_vmem [thread:$0]  %s0, 128, %s22, [#allocation3], 64, 64, 4
    $region5: #{tpu_custom_call.1} parent=1 // pred_fallthru
      _
    // Predicated region
    $region6: #{tpu_custom_call.1} parent=1 // pred_check
      _
    $region7: #{tpu_custom_call.1} parent=1 // pred_check_branch
      %29 = sbr.rel (0) target = $region9
    $region8: #{tpu_custom_call.1} parent=1 // pred_region
      %s31 = ssub.s32 2048, 2048
      %32 = vsyncadd [#allocation6], %s31
      %s33 = sshll.u32 [#allocation5], 4
      %s34 = int_to_ptr.vmem [resolvable:$true] %s33
      %39 = dma.hbm_to_vmem [thread:$0]  %s1, 2048, %s34, [#allocation6], 128, 128, 8
    $region9: #{tpu_custom_call.1} parent=1 // pred_fallthru
      _
    // Predicated region
    $region10: #{tpu_custom_call.1} parent=1 // pred_check
      _
    $region11: #{tpu_custom_call.1} parent=1 // pred_check_branch
      %41 = sbr.rel (0) target = $region13
    $region12: #{tpu_custom_call.1} parent=1 // pred_region
      _
    $region13: #{tpu_custom_call.1} parent=1 // pred_fallthru
      _
    // Predicated region
    $region14: #{tpu_custom_call.1} parent=1 // pred_check
      _
    $region15: #{tpu_custom_call.1} parent=1 // pred_check_branch
      %43 = sbr.rel (0) target = $region17
    $region16: #{tpu_custom_call.1} parent=1 // pred_region
      %s45 = ssub.s32 8192, 8192
      %46 = vsyncadd [#allocation6], %s45
      %s47 = sshll.u32 [#allocation7], 4
      %s48 = int_to_ptr.vmem [resolvable:$true] %s47
      %53 = dma.hbm_to_vmem [thread:$0]  %s3, 8192, %s48, [#allocation6], 256, 256, 16
    $region17: #{tpu_custom_call.1} parent=1 // pred_fallthru
      _
    // Predicated region
    $region18: #{tpu_custom_call.1} parent=1 // pred_check
      _
    $region19: #{tpu_custom_call.1} parent=1 // pred_check_branch
      %55 = sbr.rel (0) target = $region21
    $region20: #{tpu_custom_call.1} parent=1 // pred_region
      _
    $region21: #{tpu_custom_call.1} parent=1 // pred_fallthru
      _
    // Predicated region
    $region22: #{tpu_custom_call.1} parent=1 // pred_check
      _
    $region23: #{tpu_custom_call.1} parent=1 // pred_check_branch
      %57 = sbr.rel (0) target = $region25
    $region24: #{tpu_custom_call.1} parent=1 // pred_region
      %s59 = ssub.s32 28672, 28672
      %60 = vsyncadd [#allocation9], %s59
      %s61 = sshll.u32 [#allocation8], 4
      %s62 = int_to_ptr.vmem [resolvable:$true] %s61
      %67 = dma.hbm_to_vmem [thread:$0]  %s5, 28672, %s62, [#allocation9], 448, 448, 28
    $region25: #{tpu_custom_call.1} parent=1 // pred_fallthru
      _
    // Predicated region
    $region26: #{tpu_custom_call.1} parent=1 // pred_check
      _
    $region27: #{tpu_custom_call.1} parent=1 // pred_check_branch
      %69 = sbr.rel (0) target = $region29
    $region28: #{tpu_custom_call.1} parent=1 // pred_region
      _
    $region29: #{tpu_custom_call.1} parent=1 // pred_fallthru
      _
    // Predicated region
    $region30: #{tpu_custom_call.1} parent=1 // pred_check
      _
    $region31: #{tpu_custom_call.1} parent=1 // pred_check_branch
      %71 = sbr.rel (0) target = $region33
    $region32: #{tpu_custom_call.1} parent=1 // pred_region
      %72 = dma.done [#allocation3], 128
    $region33: #{tpu_custom_call.1} parent=1 // pred_fallthru
      _
    // Predicated region
    $region34: #{tpu_custom_call.1} parent=1 // pred_check
      _
    $region35: #{tpu_custom_call.1} parent=1 // pred_check_branch
      %74 = sbr.rel (0) target = $region37
    $region36: #{tpu_custom_call.1} parent=1 // pred_region
      %75 = dma.done [#allocation6], 2048
    $region37: #{tpu_custom_call.1} parent=1 // pred_fallthru
      _
    // Predicated region
    $region38: #{tpu_custom_call.1} parent=1 // pred_check
      _
    $region39: #{tpu_custom_call.1} parent=1 // pred_check_branch
      %77 = sbr.rel (0) target = $region41
    $region40: #{tpu_custom_call.1} parent=1 // pred_region
      %78 = dma.done [#allocation6], 8192
    $region41: #{tpu_custom_call.1} parent=1 // pred_fallthru
      _
    // Predicated region
    $region42: #{tpu_custom_call.1} parent=1 // pred_check
      _
    $region43: #{tpu_custom_call.1} parent=1 // pred_check_branch
      %80 = sbr.rel (0) target = $region45
    $region44: #{tpu_custom_call.1} parent=1 // pred_region
      %81 = dma.done [#allocation9], 28672
    $region45: #{tpu_custom_call.1} parent=1 // pred_fallthru
      _
    %v83 = vld [vmem:[#allocation2] sm:$0xf]
    %v84 = vld [vmem:[#allocation2 + $0x4] sm:$0xf]
    %v85 = vld [vmem:[#allocation5] sm:$0xff]
    %v86 = vld [vmem:[#allocation5 + $0x8] sm:$0xff]
    %v87 = vld [vmem:[#allocation5 + $0x10] sm:$0xff]
    %v88 = vld [vmem:[#allocation5 + $0x18] sm:$0xff]
    %v89 = vld [vmem:[#allocation5 + $0x20] sm:$0xff]
    %v90 = vld [vmem:[#allocation5 + $0x28] sm:$0xff]
    %v91 = vld [vmem:[#allocation5 + $0x30] sm:$0xff]
    %v92 = vld [vmem:[#allocation5 + $0x38] sm:$0xff]
    %v93 = vld [vmem:[#allocation5 + $0x40] sm:$0xff]
    %v94 = vld [vmem:[#allocation5 + $0x48] sm:$0xff]
    %v95 = vld [vmem:[#allocation5 + $0x50] sm:$0xff]
    %v96 = vld [vmem:[#allocation5 + $0x58] sm:$0xff]
    %v97 = vld [vmem:[#allocation5 + $0x60] sm:$0xff]
    %v98 = vld [vmem:[#allocation5 + $0x68] sm:$0xff]
    %v99 = vld [vmem:[#allocation5 + $0x70] sm:$0xff]
    %v100 = vld [vmem:[#allocation5 + $0x78] sm:$0xff]
    %v101 = vld [vmem:[%s2] sm:$0x3]
    %v103 = vlaneseq
    %v104 = vshrl.u32 %v103, 7
    %v105 = vsub.s32 0, %v104
    %v106 = vrot.slane %v101, %v105
    %v107 = vlaneseq
    %v108 = vshrl.u32 %v107, 7
    %v109 = vsub.s32 1, %v108
    %v110 = vrot.slane %v101, %v109
    %v115 = vunpack.c.l.b16 %v83
    %v116 = vunpack.c.l.b16 %v84
    %v117 = vpack.c.b16 %v116, %v115
    %v135 = vunpack.c.l.b16 %v85
    %v136 = vunpack.c.h.b16 %v85
    %v137 = vunpack.c.l.b16 %v86
    %v138 = vunpack.c.h.b16 %v86
    %v139 = vunpack.c.l.b16 %v87
    %v140 = vunpack.c.h.b16 %v87
    %v141 = vunpack.c.l.b16 %v88
    %v142 = vunpack.c.h.b16 %v88
    %v143 = vunpack.c.l.b16 %v89
    %v144 = vunpack.c.h.b16 %v89
    %v145 = vunpack.c.l.b16 %v90
    %v146 = vunpack.c.h.b16 %v90
    %v147 = vunpack.c.l.b16 %v91
    %v148 = vunpack.c.h.b16 %v91
    %v149 = vunpack.c.l.b16 %v92
    %v150 = vunpack.c.h.b16 %v92
    %v151 = vunpack.c.l.b16 %v93
    %v152 = vunpack.c.h.b16 %v93
    %v153 = vunpack.c.l.b16 %v94
    %v154 = vunpack.c.h.b16 %v94
    %v155 = vunpack.c.l.b16 %v95
    %v156 = vunpack.c.h.b16 %v95
    %v157 = vunpack.c.l.b16 %v96
    %v158 = vunpack.c.h.b16 %v96
    %v159 = vunpack.c.l.b16 %v97
    %v160 = vunpack.c.h.b16 %v97
    %v161 = vunpack.c.l.b16 %v98
    %v162 = vunpack.c.h.b16 %v98
    %v163 = vunpack.c.l.b16 %v99
    %v164 = vunpack.c.h.b16 %v99
    %v165 = vunpack.c.l.b16 %v100
    %v166 = vunpack.c.h.b16 %v100
    %v167 = vpack.c.b16 %v137, %v135
    %v168 = vpack.c.b16 %v138, %v136
    %v169 = vpack.c.b16 %v141, %v139
    %v170 = vpack.c.b16 %v142, %v140
    %v171 = vpack.c.b16 %v145, %v143
    %v172 = vpack.c.b16 %v146, %v144
    %v173 = vpack.c.b16 %v149, %v147
    %v174 = vpack.c.b16 %v150, %v148
    %v175 = vpack.c.b16 %v153, %v151
    %v176 = vpack.c.b16 %v154, %v152
    %v177 = vpack.c.b16 %v157, %v155
    %v178 = vpack.c.b16 %v158, %v156
    %v179 = vpack.c.b16 %v161, %v159
    %v180 = vpack.c.b16 %v162, %v160
    %v181 = vpack.c.b16 %v165, %v163
    %v182 = vpack.c.b16 %v166, %v164
    %199 = vmatprep.subr.bf16.mxu0 %v168
    %200 = vmatpush1.bf16.msra.mxu0 %v167
    %201 = vmatprep.subr.bf16.mxu0 %v170
    %202 = vmatpush1.bf16.msra.mxu0 %v169
    %203 = vmatprep.subr.bf16.mxu0 %v172
    %204 = vmatpush1.bf16.msra.mxu0 %v171
    %205 = vmatprep.subr.bf16.mxu0 %v174
    %206 = vmatpush1.bf16.msra.mxu0 %v173
    %207 = vmatprep.subr.bf16.mxu0 %v176
    %208 = vmatpush1.bf16.msra.mxu0 %v175
    %209 = vmatprep.subr.bf16.mxu0 %v178
    %210 = vmatpush1.bf16.msra.mxu0 %v177
    %211 = vmatprep.subr.bf16.mxu0 %v180
    %212 = vmatpush1.bf16.msra.mxu0 %v179
    %213 = vmatprep.subr.bf16.mxu0 %v182
    %214 = vmatpush1.bf16.msra.mxu0 %v181
    %215 = vmatprep.subr.bf16.mxu0 0
    %216 = vmatpush1.bf16.msra.mxu0 0
    %217 = vmatprep.subr.bf16.mxu0 0
    %218 = vmatpush1.bf16.msra.mxu0 0
    %219 = vmatprep.subr.bf16.mxu0 0
    %220 = vmatpush1.bf16.msra.mxu0 0
    %221 = vmatprep.subr.bf16.mxu0 0
    %222 = vmatpush1.bf16.msra.mxu0 0
    %223 = vmatprep.subr.bf16.mxu0 0
    %224 = vmatpush1.bf16.msra.mxu0 0
    %225 = vmatprep.subr.bf16.mxu0 0
    %226 = vmatpush1.bf16.msra.mxu0 0
    %227 = vmatprep.subr.bf16.mxu0 0
    %228 = vmatpush1.bf16.msra.mxu0 0
    %229 = vmatprep.subr.bf16.mxu0 0
    %230 = vmatpush1.bf16.msra.mxu0 0
    %231 = vmatprep.mubr.bf16.mxu0 0
    %232 = vmatmul.mubr.bf16.gmra.mrb[0].mxu0 %v117
    %v233 = vpop.f32.mrb[0].mxu0
    %v234 = vadd.f32 %v106, %v233
    %v235 = vpop.f32.mrb[0].mxu0
    %v236 = vadd.f32 %v110, %v235
    %v237 = vpop.f32.mrb[0].mxu0
    %v238 = vadd.f32 %v106, %v237
    %v239 = vpop.f32.mrb[0].mxu0
    %v240 = vadd.f32 %v110, %v239
    %241 = vdwg.mxu0
    %v242 = vmax.f32 %v234, 0.0
    %v243 = vmax.f32 %v236, 0.0
    %v244 = vmax.f32 %v238, 0.0
    %v245 = vmax.f32 %v240, 0.0
    %v246 = vpack.c.bf16 %v244, %v242
    %v247 = vpack.c.bf16 %v245, %v243
    %v248 = vld [vmem:[#allocation7] sm:$0xff]
    %v249 = vld [vmem:[#allocation7 + $0x8] sm:$0xff]
    %v250 = vld [vmem:[#allocation7 + $0x10] sm:$0xff]
    %v251 = vld [vmem:[#allocation7 + $0x18] sm:$0xff]
    %v252 = vld [vmem:[#allocation7 + $0x20] sm:$0xff]
    %v253 = vld [vmem:[#allocation7 + $0x28] sm:$0xff]
    %v254 = vld [vmem:[#allocation7 + $0x30] sm:$0xff]
    %v255 = vld [vmem:[#allocation7 + $0x38] sm:$0xff]
    %v256 = vld [vmem:[#allocation7 + $0x40] sm:$0xff]
    %v257 = vld [vmem:[#allocation7 + $0x48] sm:$0xff]
    %v258 = vld [vmem:[#allocation7 + $0x50] sm:$0xff]
    %v259 = vld [vmem:[#allocation7 + $0x58] sm:$0xff]
    %v260 = vld [vmem:[#allocation7 + $0x60] sm:$0xff]
    %v261 = vld [vmem:[#allocation7 + $0x68] sm:$0xff]
    %v262 = vld [vmem:[#allocation7 + $0x70] sm:$0xff]
    %v263 = vld [vmem:[#allocation7 + $0x78] sm:$0xff]
    %v264 = vld [vmem:[#allocation7 + $0x80] sm:$0xff]
    %v265 = vld [vmem:[#allocation7 + $0x88] sm:$0xff]
    %v266 = vld [vmem:[#allocation7 + $0x90] sm:$0xff]
    %v267 = vld [vmem:[#allocation7 + $0x98] sm:$0xff]
    %v268 = vld [vmem:[#allocation7 + $0xa0] sm:$0xff]
    %v269 = vld [vmem:[#allocation7 + $0xa8] sm:$0xff]
    %v270 = vld [vmem:[#allocation7 + $0xb0] sm:$0xff]
    %v271 = vld [vmem:[#allocation7 + $0xb8] sm:$0xff]
    %v272 = vld [vmem:[#allocation7 + $0xc0] sm:$0xff]
    %v273 = vld [vmem:[#allocation7 + $0xc8] sm:$0xff]
    %v274 = vld [vmem:[#allocation7 + $0xd0] sm:$0xff]
    %v275 = vld [vmem:[#allocation7 + $0xd8] sm:$0xff]
    %v276 = vld [vmem:[#allocation7 + $0xe0] sm:$0xff]
    %v277 = vld [vmem:[#allocation7 + $0xe8] sm:$0xff]
    %v278 = vld [vmem:[#allocation7 + $0xf0] sm:$0xff]
    %v279 = vld [vmem:[#allocation7 + $0xf8] sm:$0xff]
    %v280 = vld [vmem:[#allocation7 + $0x100] sm:$0xff]
    %v281 = vld [vmem:[#allocation7 + $0x108] sm:$0xff]
    %v282 = vld [vmem:[#allocation7 + $0x110] sm:$0xff]
    %v283 = vld [vmem:[#allocation7 + $0x118] sm:$0xff]
    %v284 = vld [vmem:[#allocation7 + $0x120] sm:$0xff]
    %v285 = vld [vmem:[#allocation7 + $0x128] sm:$0xff]
    %v286 = vld [vmem:[#allocation7 + $0x130] sm:$0xff]
    %v287 = vld [vmem:[#allocation7 + $0x138] sm:$0xff]
    %v288 = vld [vmem:[#allocation7 + $0x140] sm:$0xff]
    %v289 = vld [vmem:[#allocation7 + $0x148] sm:$0xff]
    %v290 = vld [vmem:[#allocation7 + $0x150] sm:$0xff]
    %v291 = vld [vmem:[#allocation7 + $0x158] sm:$0xff]
    %v292 = vld [vmem:[#allocation7 + $0x160] sm:$0xff]
    %v293 = vld [vmem:[#allocation7 + $0x168] sm:$0xff]
    %v294 = vld [vmem:[#allocation7 + $0x170] sm:$0xff]
    %v295 = vld [vmem:[#allocation7 + $0x178] sm:$0xff]
    %v296 = vld [vmem:[#allocation7 + $0x180] sm:$0xff]
    %v297 = vld [vmem:[#allocation7 + $0x188] sm:$0xff]
    %v298 = vld [vmem:[#allocation7 + $0x190] sm:$0xff]
    %v299 = vld [vmem:[#allocation7 + $0x198] sm:$0xff]
    %v300 = vld [vmem:[#allocation7 + $0x1a0] sm:$0xff]
    %v301 = vld [vmem:[#allocation7 + $0x1a8] sm:$0xff]
    %v302 = vld [vmem:[#allocation7 + $0x1b0] sm:$0xff]
    %v303 = vld [vmem:[#allocation7 + $0x1b8] sm:$0xff]
    %v304 = vld [vmem:[#allocation7 + $0x1c0] sm:$0xff]
    %v305 = vld [vmem:[#allocation7 + $0x1c8] sm:$0xff]
    %v306 = vld [vmem:[#allocation7 + $0x1d0] sm:$0xff]
    %v307 = vld [vmem:[#allocation7 + $0x1d8] sm:$0xff]
    %v308 = vld [vmem:[#allocation7 + $0x1e0] sm:$0xff]
    %v309 = vld [vmem:[#allocation7 + $0x1e8] sm:$0xff]
    %v310 = vld [vmem:[#allocation7 + $0x1f0] sm:$0xff]
    %v311 = vld [vmem:[#allocation7 + $0x1f8] sm:$0xff]
    %v312 = vld [vmem:[%s4] sm:$0xf]
    %v314 = vlaneseq
    %v315 = vshrl.u32 %v314, 7
    %v316 = vsub.s32 0, %v315
    %v317 = vrot.slane %v312, %v316
    %v318 = vlaneseq
    %v319 = vshrl.u32 %v318, 7
    %v320 = vsub.s32 1, %v319
    %v321 = vrot.slane %v312, %v320
    %v322 = vlaneseq
    %v323 = vshrl.u32 %v322, 7
    %v324 = vsub.s32 2, %v323
    %v325 = vrot.slane %v312, %v324
    %v326 = vlaneseq
    %v327 = vshrl.u32 %v326, 7
    %v328 = vsub.s32 3, %v327
    %v329 = vrot.slane %v312, %v328
    %v398 = vunpack.c.l.b16 %v248
    %v399 = vunpack.c.h.b16 %v248
    %v400 = vunpack.c.l.b16 %v249
    %v401 = vunpack.c.h.b16 %v249
    %v402 = vunpack.c.l.b16 %v250
    %v403 = vunpack.c.h.b16 %v250
    %v404 = vunpack.c.l.b16 %v251
    %v405 = vunpack.c.h.b16 %v251
    %v406 = vunpack.c.l.b16 %v252
    %v407 = vunpack.c.h.b16 %v252
    %v408 = vunpack.c.l.b16 %v253
    %v409 = vunpack.c.h.b16 %v253
    %v410 = vunpack.c.l.b16 %v254
    %v411 = vunpack.c.h.b16 %v254
    %v412 = vunpack.c.l.b16 %v255
    %v413 = vunpack.c.h.b16 %v255
    %v414 = vunpack.c.l.b16 %v256
    %v415 = vunpack.c.h.b16 %v256
    %v416 = vunpack.c.l.b16 %v257
    %v417 = vunpack.c.h.b16 %v257
    %v418 = vunpack.c.l.b16 %v258
    %v419 = vunpack.c.h.b16 %v258
    %v420 = vunpack.c.l.b16 %v259
    %v421 = vunpack.c.h.b16 %v259
    %v422 = vunpack.c.l.b16 %v260
    %v423 = vunpack.c.h.b16 %v260
    %v424 = vunpack.c.l.b16 %v261
    %v425 = vunpack.c.h.b16 %v261
    %v426 = vunpack.c.l.b16 %v262
    %v427 = vunpack.c.h.b16 %v262
    %v428 = vunpack.c.l.b16 %v263
    %v429 = vunpack.c.h.b16 %v263
    %v430 = vunpack.c.l.b16 %v264
    %v431 = vunpack.c.h.b16 %v264
    %v432 = vunpack.c.l.b16 %v265
    %v433 = vunpack.c.h.b16 %v265
    %v434 = vunpack.c.l.b16 %v266
    %v435 = vunpack.c.h.b16 %v266
    %v436 = vunpack.c.l.b16 %v267
    %v437 = vunpack.c.h.b16 %v267
    %v438 = vunpack.c.l.b16 %v268
    %v439 = vunpack.c.h.b16 %v268
    %v440 = vunpack.c.l.b16 %v269
    %v441 = vunpack.c.h.b16 %v269
    %v442 = vunpack.c.l.b16 %v270
    %v443 = vunpack.c.h.b16 %v270
    %v444 = vunpack.c.l.b16 %v271
    %v445 = vunpack.c.h.b16 %v271
    %v446 = vunpack.c.l.b16 %v272
    %v447 = vunpack.c.h.b16 %v272
    %v448 = vunpack.c.l.b16 %v273
    %v449 = vunpack.c.h.b16 %v273
    %v450 = vunpack.c.l.b16 %v274
    %v451 = vunpack.c.h.b16 %v274
    %v452 = vunpack.c.l.b16 %v275
    %v453 = vunpack.c.h.b16 %v275
    %v454 = vunpack.c.l.b16 %v276
    %v455 = vunpack.c.h.b16 %v276
    %v456 = vunpack.c.l.b16 %v277
    %v457 = vunpack.c.h.b16 %v277
    %v458 = vunpack.c.l.b16 %v278
    %v459 = vunpack.c.h.b16 %v278
    %v460 = vunpack.c.l.b16 %v279
    %v461 = vunpack.c.h.b16 %v279
    %v462 = vunpack.c.l.b16 %v280
    %v463 = vunpack.c.h.b16 %v280
    %v464 = vunpack.c.l.b16 %v281
    %v465 = vunpack.c.h.b16 %v281
    %v466 = vunpack.c.l.b16 %v282
    %v467 = vunpack.c.h.b16 %v282
    %v468 = vunpack.c.l.b16 %v283
    %v469 = vunpack.c.h.b16 %v283
    %v470 = vunpack.c.l.b16 %v284
    %v471 = vunpack.c.h.b16 %v284
    %v472 = vunpack.c.l.b16 %v285
    %v473 = vunpack.c.h.b16 %v285
    %v474 = vunpack.c.l.b16 %v286
    %v475 = vunpack.c.h.b16 %v286
    %v476 = vunpack.c.l.b16 %v287
    %v477 = vunpack.c.h.b16 %v287
    %v478 = vunpack.c.l.b16 %v288
    %v479 = vunpack.c.h.b16 %v288
    %v480 = vunpack.c.l.b16 %v289
    %v481 = vunpack.c.h.b16 %v289
    %v482 = vunpack.c.l.b16 %v290
    %v483 = vunpack.c.h.b16 %v290
    %v484 = vunpack.c.l.b16 %v291
    %v485 = vunpack.c.h.b16 %v291
    %v486 = vunpack.c.l.b16 %v292
    %v487 = vunpack.c.h.b16 %v292
    %v488 = vunpack.c.l.b16 %v293
    %v489 = vunpack.c.h.b16 %v293
    %v490 = vunpack.c.l.b16 %v294
    %v491 = vunpack.c.h.b16 %v294
    %v492 = vunpack.c.l.b16 %v295
    %v493 = vunpack.c.h.b16 %v295
    %v494 = vunpack.c.l.b16 %v296
    %v495 = vunpack.c.h.b16 %v296
    %v496 = vunpack.c.l.b16 %v297
    %v497 = vunpack.c.h.b16 %v297
    %v498 = vunpack.c.l.b16 %v298
    %v499 = vunpack.c.h.b16 %v298
    %v500 = vunpack.c.l.b16 %v299
    %v501 = vunpack.c.h.b16 %v299
    %v502 = vunpack.c.l.b16 %v300
    %v503 = vunpack.c.h.b16 %v300
    %v504 = vunpack.c.l.b16 %v301
    %v505 = vunpack.c.h.b16 %v301
    %v506 = vunpack.c.l.b16 %v302
    %v507 = vunpack.c.h.b16 %v302
    %v508 = vunpack.c.l.b16 %v303
    %v509 = vunpack.c.h.b16 %v303
    %v510 = vunpack.c.l.b16 %v304
    %v511 = vunpack.c.h.b16 %v304
    %v512 = vunpack.c.l.b16 %v305
    %v513 = vunpack.c.h.b16 %v305
    %v514 = vunpack.c.l.b16 %v306
    %v515 = vunpack.c.h.b16 %v306
    %v516 = vunpack.c.l.b16 %v307
    %v517 = vunpack.c.h.b16 %v307
    %v518 = vunpack.c.l.b16 %v308
    %v519 = vunpack.c.h.b16 %v308
    %v520 = vunpack.c.l.b16 %v309
    %v521 = vunpack.c.h.b16 %v309
    %v522 = vunpack.c.l.b16 %v310
    %v523 = vunpack.c.h.b16 %v310
    %v524 = vunpack.c.l.b16 %v311
    %v525 = vunpack.c.h.b16 %v311
    %v526 = vpack.c.b16 %v402, %v398
    %v527 = vpack.c.b16 %v403, %v399
    %v528 = vpack.c.b16 %v404, %v400
    %v529 = vpack.c.b16 %v405, %v401
    %v530 = vpack.c.b16 %v410, %v406
    %v531 = vpack.c.b16 %v411, %v407
    %v532 = vpack.c.b16 %v412, %v408
    %v533 = vpack.c.b16 %v413, %v409
    %v534 = vpack.c.b16 %v418, %v414
    %v535 = vpack.c.b16 %v419, %v415
    %v536 = vpack.c.b16 %v420, %v416
    %v537 = vpack.c.b16 %v421, %v417
    %v538 = vpack.c.b16 %v426, %v422
    %v539 = vpack.c.b16 %v427, %v423
    %v540 = vpack.c.b16 %v428, %v424
    %v541 = vpack.c.b16 %v429, %v425
    %v542 = vpack.c.b16 %v434, %v430
    %v543 = vpack.c.b16 %v435, %v431
    %v544 = vpack.c.b16 %v436, %v432
    %v545 = vpack.c.b16 %v437, %v433
    %v546 = vpack.c.b16 %v442, %v438
    %v547 = vpack.c.b16 %v443, %v439
    %v548 = vpack.c.b16 %v444, %v440
    %v549 = vpack.c.b16 %v445, %v441
    %v550 = vpack.c.b16 %v450, %v446
    %v551 = vpack.c.b16 %v451, %v447
    %v552 = vpack.c.b16 %v452, %v448
    %v553 = vpack.c.b16 %v453, %v449
    %v554 = vpack.c.b16 %v458, %v454
    %v555 = vpack.c.b16 %v459, %v455
    %v556 = vpack.c.b16 %v460, %v456
    %v557 = vpack.c.b16 %v461, %v457
    %v558 = vpack.c.b16 %v466, %v462
    %v559 = vpack.c.b16 %v467, %v463
    %v560 = vpack.c.b16 %v468, %v464
    %v561 = vpack.c.b16 %v469, %v465
    %v562 = vpack.c.b16 %v474, %v470
    %v563 = vpack.c.b16 %v475, %v471
    %v564 = vpack.c.b16 %v476, %v472
    %v565 = vpack.c.b16 %v477, %v473
    %v566 = vpack.c.b16 %v482, %v478
    %v567 = vpack.c.b16 %v483, %v479
    %v568 = vpack.c.b16 %v484, %v480
    %v569 = vpack.c.b16 %v485, %v481
    %v570 = vpack.c.b16 %v490, %v486
    %v571 = vpack.c.b16 %v491, %v487
    %v572 = vpack.c.b16 %v492, %v488
    %v573 = vpack.c.b16 %v493, %v489
    %v574 = vpack.c.b16 %v498, %v494
    %v575 = vpack.c.b16 %v499, %v495
    %v576 = vpack.c.b16 %v500, %v496
    %v577 = vpack.c.b16 %v501, %v497
    %v578 = vpack.c.b16 %v506, %v502
    %v579 = vpack.c.b16 %v507, %v503
    %v580 = vpack.c.b16 %v508, %v504
    %v581 = vpack.c.b16 %v509, %v505
    %v582 = vpack.c.b16 %v514, %v510
    %v583 = vpack.c.b16 %v515, %v511
    %v584 = vpack.c.b16 %v516, %v512
    %v585 = vpack.c.b16 %v517, %v513
    %v586 = vpack.c.b16 %v522, %v518
    %v587 = vpack.c.b16 %v523, %v519
    %v588 = vpack.c.b16 %v524, %v520
    %v589 = vpack.c.b16 %v525, %v521
    %654 = vmatprep.subr.bf16.mxu0 %v527
    %655 = vmatpush1.bf16.msra.mxu0 %v526
    %656 = vmatprep.subr.bf16.mxu0 %v531
    %657 = vmatpush1.bf16.msra.mxu0 %v530
    %658 = vmatprep.subr.bf16.mxu0 %v535
    %659 = vmatpush1.bf16.msra.mxu0 %v534
    %660 = vmatprep.subr.bf16.mxu0 %v539
    %661 = vmatpush1.bf16.msra.mxu0 %v538
    %662 = vmatprep.subr.bf16.mxu0 %v543
    %663 = vmatpush1.bf16.msra.mxu0 %v542
    %664 = vmatprep.subr.bf16.mxu0 %v547
    %665 = vmatpush1.bf16.msra.mxu0 %v546
    %666 = vmatprep.subr.bf16.mxu0 %v551
    %667 = vmatpush1.bf16.msra.mxu0 %v550
    %668 = vmatprep.subr.bf16.mxu0 %v555
    %669 = vmatpush1.bf16.msra.mxu0 %v554
    %670 = vmatprep.subr.bf16.mxu0 %v559
    %671 = vmatpush1.bf16.msra.mxu0 %v558
    %672 = vmatprep.subr.bf16.mxu0 %v563
    %673 = vmatpush1.bf16.msra.mxu0 %v562
    %674 = vmatprep.subr.bf16.mxu0 %v567
    %675 = vmatpush1.bf16.msra.mxu0 %v566
    %676 = vmatprep.subr.bf16.mxu0 %v571
    %677 = vmatpush1.bf16.msra.mxu0 %v570
    %678 = vmatprep.subr.bf16.mxu0 %v575
    %679 = vmatpush1.bf16.msra.mxu0 %v574
    %680 = vmatprep.subr.bf16.mxu0 %v579
    %681 = vmatpush1.bf16.msra.mxu0 %v578
    %682 = vmatprep.subr.bf16.mxu0 %v583
    %683 = vmatpush1.bf16.msra.mxu0 %v582
    %684 = vmatprep.subr.bf16.mxu0 %v587
    %685 = vmatpush1.bf16.msra.mxu0 %v586
    %686 = vmatprep.mubr.bf16.mxu0 %v247
    %687 = vmatmul.mubr.bf16.gmra.mrb[0].mxu0 %v246
    %v688 = vpop.f32.mrb[0].mxu0
    %v689 = vadd.f32 %v317, %v688
    %v690 = vpop.f32.mrb[0].mxu0
    %v691 = vadd.f32 %v321, %v690
    %v692 = vpop.f32.mrb[0].mxu0
    %v693 = vadd.f32 %v317, %v692
    %v694 = vpop.f32.mrb[0].mxu0
    %v695 = vadd.f32 %v321, %v694
    %696 = vdwg.mxu0
    %697 = vmatprep.subr.bf16.mxu0 %v529
    %698 = vmatpush1.bf16.msra.mxu0 %v528
    %699 = vmatprep.subr.bf16.mxu0 %v533
    %700 = vmatpush1.bf16.msra.mxu0 %v532
    %701 = vmatprep.subr.bf16.mxu0 %v537
    %702 = vmatpush1.bf16.msra.mxu0 %v536
    %703 = vmatprep.subr.bf16.mxu0 %v541
    %704 = vmatpush1.bf16.msra.mxu0 %v540
    %705 = vmatprep.subr.bf16.mxu0 %v545
    %706 = vmatpush1.bf16.msra.mxu0 %v544
    %707 = vmatprep.subr.bf16.mxu0 %v549
    %708 = vmatpush1.bf16.msra.mxu0 %v548
    %709 = vmatprep.subr.bf16.mxu0 %v553
    %710 = vmatpush1.bf16.msra.mxu0 %v552
    %711 = vmatprep.subr.bf16.mxu0 %v557
    %712 = vmatpush1.bf16.msra.mxu0 %v556
    %713 = vmatprep.subr.bf16.mxu0 %v561
    %714 = vmatpush1.bf16.msra.mxu0 %v560
    %715 = vmatprep.subr.bf16.mxu0 %v565
    %716 = vmatpush1.bf16.msra.mxu0 %v564
    %717 = vmatprep.subr.bf16.mxu0 %v569
    %718 = vmatpush1.bf16.msra.mxu0 %v568
    %719 = vmatprep.subr.bf16.mxu0 %v573
    %720 = vmatpush1.bf16.msra.mxu0 %v572
    %721 = vmatprep.subr.bf16.mxu0 %v577
    %722 = vmatpush1.bf16.msra.mxu0 %v576
    %723 = vmatprep.subr.bf16.mxu0 %v581
    %724 = vmatpush1.bf16.msra.mxu0 %v580
    %725 = vmatprep.subr.bf16.mxu0 %v585
    %726 = vmatpush1.bf16.msra.mxu0 %v584
    %727 = vmatprep.subr.bf16.mxu0 %v589
    %728 = vmatpush1.bf16.msra.mxu0 %v588
    %729 = vmatprep.mubr.bf16.mxu0 %v247
    %730 = vmatmul.mubr.bf16.gmra.mrb[0].mxu0 %v246
    %v731 = vpop.f32.mrb[0].mxu0
    %v732 = vadd.f32 %v325, %v731
    %v733 = vpop.f32.mrb[0].mxu0
    %v734 = vadd.f32 %v329, %v733
    %v735 = vpop.f32.mrb[0].mxu0
    %v736 = vadd.f32 %v325, %v735
    %v737 = vpop.f32.mrb[0].mxu0
    %v738 = vadd.f32 %v329, %v737
    %739 = vdwg.mxu0
    %v740 = vmax.f32 %v689, 0.0
    %v741 = vmax.f32 %v691, 0.0
    %v742 = vmax.f32 %v732, 0.0
    %v743 = vmax.f32 %v734, 0.0
    %v744 = vmax.f32 %v693, 0.0
    %v745 = vmax.f32 %v695, 0.0
    %v746 = vmax.f32 %v736, 0.0
    %v747 = vmax.f32 %v738, 0.0
    %v748 = vpack.c.bf16 %v744, %v740
    %v749 = vpack.c.bf16 %v745, %v741
    %v750 = vpack.c.bf16 %v746, %v742
    %v751 = vpack.c.bf16 %v747, %v743
    %v752 = vld [vmem:[#allocation8] sm:$0xff]
    %v753 = vld [vmem:[#allocation8 + $0x8] sm:$0xff]
    %v754 = vld [vmem:[#allocation8 + $0x10] sm:$0xff]
    %v755 = vld [vmem:[#allocation8 + $0x18] sm:$0xf]
    %v756 = vld [vmem:[#allocation8 + $0x1c] sm:$0xff]
    %v757 = vld [vmem:[#allocation8 + $0x24] sm:$0xff]
    %v758 = vld [vmem:[#allocation8 + $0x2c] sm:$0xff]
    %v759 = vld [vmem:[#allocation8 + $0x34] sm:$0xf]
    %v760 = vld [vmem:[#allocation8 + $0x38] sm:$0xff]
    %v761 = vld [vmem:[#allocation8 + $0x40] sm:$0xff]
    %v762 = vld [vmem:[#allocation8 + $0x48] sm:$0xff]
    %v763 = vld [vmem:[#allocation8 + $0x50] sm:$0xf]
    %v764 = vld [vmem:[#allocation8 + $0x54] sm:$0xff]
    %v765 = vld [vmem:[#allocation8 + $0x5c] sm:$0xff]
    %v766 = vld [vmem:[#allocation8 + $0x64] sm:$0xff]
    %v767 = vld [vmem:[#allocation8 + $0x6c] sm:$0xf]
    %v768 = vld [vmem:[#allocation8 + $0x70] sm:$0xff]
    %v769 = vld [vmem:[#allocation8 + $0x78] sm:$0xff]
    %v770 = vld [vmem:[#allocation8 + $0x80] sm:$0xff]
    %v771 = vld [vmem:[#allocation8 + $0x88] sm:$0xf]
    %v772 = vld [vmem:[#allocation8 + $0x8c] sm:$0xff]
    %v773 = vld [vmem:[#allocation8 + $0x94] sm:$0xff]
    %v774 = vld [vmem:[#allocation8 + $0x9c] sm:$0xff]
    %v775 = vld [vmem:[#allocation8 + $0xa4] sm:$0xf]
    %v776 = vld [vmem:[#allocation8 + $0xa8] sm:$0xff]
    %v777 = vld [vmem:[#allocation8 + $0xb0] sm:$0xff]
    %v778 = vld [vmem:[#allocation8 + $0xb8] sm:$0xff]
    %v779 = vld [vmem:[#allocation8 + $0xc0] sm:$0xf]
    %v780 = vld [vmem:[#allocation8 + $0xc4] sm:$0xff]
    %v781 = vld [vmem:[#allocation8 + $0xcc] sm:$0xff]
    %v782 = vld [vmem:[#allocation8 + $0xd4] sm:$0xff]
    %v783 = vld [vmem:[#allocation8 + $0xdc] sm:$0xf]
    %v784 = vld [vmem:[#allocation8 + $0xe0] sm:$0xff]
    %v785 = vld [vmem:[#allocation8 + $0xe8] sm:$0xff]
    %v786 = vld [vmem:[#allocation8 + $0xf0] sm:$0xff]
    %v787 = vld [vmem:[#allocation8 + $0xf8] sm:$0xf]
    %v788 = vld [vmem:[#allocation8 + $0xfc] sm:$0xff]
    %v789 = vld [vmem:[#allocation8 + $0x104] sm:$0xff]
    %v790 = vld [vmem:[#allocation8 + $0x10c] sm:$0xff]
    %v791 = vld [vmem:[#allocation8 + $0x114] sm:$0xf]
    %v792 = vld [vmem:[#allocation8 + $0x118] sm:$0xff]
    %v793 = vld [vmem:[#allocation8 + $0x120] sm:$0xff]
    %v794 = vld [vmem:[#allocation8 + $0x128] sm:$0xff]
    %v795 = vld [vmem:[#allocation8 + $0x130] sm:$0xf]
    %v796 = vld [vmem:[#allocation8 + $0x134] sm:$0xff]
    %v797 = vld [vmem:[#allocation8 + $0x13c] sm:$0xff]
    %v798 = vld [vmem:[#allocation8 + $0x144] sm:$0xff]
    %v799 = vld [vmem:[#allocation8 + $0x14c] sm:$0xf]
    %v800 = vld [vmem:[#allocation8 + $0x150] sm:$0xff]
    %v801 = vld [vmem:[#allocation8 + $0x158] sm:$0xff]
    %v802 = vld [vmem:[#allocation8 + $0x160] sm:$0xff]
    %v803 = vld [vmem:[#allocation8 + $0x168] sm:$0xf]
    %v804 = vld [vmem:[#allocation8 + $0x16c] sm:$0xff]
    %v805 = vld [vmem:[#allocation8 + $0x174] sm:$0xff]
    %v806 = vld [vmem:[#allocation8 + $0x17c] sm:$0xff]
    %v807 = vld [vmem:[#allocation8 + $0x184] sm:$0xf]
    %v808 = vld [vmem:[#allocation8 + $0x188] sm:$0xff]
    %v809 = vld [vmem:[#allocation8 + $0x190] sm:$0xff]
    %v810 = vld [vmem:[#allocation8 + $0x198] sm:$0xff]
    %v811 = vld [vmem:[#allocation8 + $0x1a0] sm:$0xf]
    %v812 = vld [vmem:[#allocation8 + $0x1a4] sm:$0xff]
    %v813 = vld [vmem:[#allocation8 + $0x1ac] sm:$0xff]
    %v814 = vld [vmem:[#allocation8 + $0x1b4] sm:$0xff]
    %v815 = vld [vmem:[#allocation8 + $0x1bc] sm:$0xf]
    %v816 = vld [vmem:[#allocation8 + $0x1c0] sm:$0xff]
    %v817 = vld [vmem:[#allocation8 + $0x1c8] sm:$0xff]
    %v818 = vld [vmem:[#allocation8 + $0x1d0] sm:$0xff]
    %v819 = vld [vmem:[#allocation8 + $0x1d8] sm:$0xf]
    %v820 = vld [vmem:[#allocation8 + $0x1dc] sm:$0xff]
    %v821 = vld [vmem:[#allocation8 + $0x1e4] sm:$0xff]
    %v822 = vld [vmem:[#allocation8 + $0x1ec] sm:$0xff]
    %v823 = vld [vmem:[#allocation8 + $0x1f4] sm:$0xf]
    %v824 = vld [vmem:[#allocation8 + $0x1f8] sm:$0xff]
    %v825 = vld [vmem:[#allocation8 + $0x200] sm:$0xff]
    %v826 = vld [vmem:[#allocation8 + $0x208] sm:$0xff]
    %v827 = vld [vmem:[#allocation8 + $0x210] sm:$0xf]
    %v828 = vld [vmem:[#allocation8 + $0x214] sm:$0xff]
    %v829 = vld [vmem:[#allocation8 + $0x21c] sm:$0xff]
    %v830 = vld [vmem:[#allocation8 + $0x224] sm:$0xff]
    %v831 = vld [vmem:[#allocation8 + $0x22c] sm:$0xf]
    %v832 = vld [vmem:[#allocation8 + $0x230] sm:$0xff]
    %v833 = vld [vmem:[#allocation8 + $0x238] sm:$0xff]
    %v834 = vld [vmem:[#allocation8 + $0x240] sm:$0xff]
    %v835 = vld [vmem:[#allocation8 + $0x248] sm:$0xf]
    %v836 = vld [vmem:[#allocation8 + $0x24c] sm:$0xff]
    %v837 = vld [vmem:[#allocation8 + $0x254] sm:$0xff]
    %v838 = vld [vmem:[#allocation8 + $0x25c] sm:$0xff]
    %v839 = vld [vmem:[#allocation8 + $0x264] sm:$0xf]
    %v840 = vld [vmem:[#allocation8 + $0x268] sm:$0xff]
    %v841 = vld [vmem:[#allocation8 + $0x270] sm:$0xff]
    %v842 = vld [vmem:[#allocation8 + $0x278] sm:$0xff]
    %v843 = vld [vmem:[#allocation8 + $0x280] sm:$0xf]
    %v844 = vld [vmem:[#allocation8 + $0x284] sm:$0xff]
    %v845 = vld [vmem:[#allocation8 + $0x28c] sm:$0xff]
    %v846 = vld [vmem:[#allocation8 + $0x294] sm:$0xff]
    %v847 = vld [vmem:[#allocation8 + $0x29c] sm:$0xf]
    %v848 = vld [vmem:[#allocation8 + $0x2a0] sm:$0xff]
    %v849 = vld [vmem:[#allocation8 + $0x2a8] sm:$0xff]
    %v850 = vld [vmem:[#allocation8 + $0x2b0] sm:$0xff]
    %v851 = vld [vmem:[#allocation8 + $0x2b8] sm:$0xf]
    %v852 = vld [vmem:[#allocation8 + $0x2bc] sm:$0xff]
    %v853 = vld [vmem:[#allocation8 + $0x2c4] sm:$0xff]
    %v854 = vld [vmem:[#allocation8 + $0x2cc] sm:$0xff]
    %v855 = vld [vmem:[#allocation8 + $0x2d4] sm:$0xf]
    %v856 = vld [vmem:[#allocation8 + $0x2d8] sm:$0xff]
    %v857 = vld [vmem:[#allocation8 + $0x2e0] sm:$0xff]
    %v858 = vld [vmem:[#allocation8 + $0x2e8] sm:$0xff]
    %v859 = vld [vmem:[#allocation8 + $0x2f0] sm:$0xf]
    %v860 = vld [vmem:[#allocation8 + $0x2f4] sm:$0xff]
    %v861 = vld [vmem:[#allocation8 + $0x2fc] sm:$0xff]
    %v862 = vld [vmem:[#allocation8 + $0x304] sm:$0xff]
    %v863 = vld [vmem:[#allocation8 + $0x30c] sm:$0xf]
    %v864 = vld [vmem:[#allocation8 + $0x310] sm:$0xff]
    %v865 = vld [vmem:[#allocation8 + $0x318] sm:$0xff]
    %v866 = vld [vmem:[#allocation8 + $0x320] sm:$0xff]
    %v867 = vld [vmem:[#allocation8 + $0x328] sm:$0xf]
    %v868 = vld [vmem:[#allocation8 + $0x32c] sm:$0xff]
    %v869 = vld [vmem:[#allocation8 + $0x334] sm:$0xff]
    %v870 = vld [vmem:[#allocation8 + $0x33c] sm:$0xff]
    %v871 = vld [vmem:[#allocation8 + $0x344] sm:$0xf]
    %v872 = vld [vmem:[#allocation8 + $0x348] sm:$0xff]
    %v873 = vld [vmem:[#allocation8 + $0x350] sm:$0xff]
    %v874 = vld [vmem:[#allocation8 + $0x358] sm:$0xff]
    %v875 = vld [vmem:[#allocation8 + $0x360] sm:$0xf]
    %v876 = vld [vmem:[#allocation8 + $0x364] sm:$0xff]
    %v877 = vld [vmem:[#allocation8 + $0x36c] sm:$0xff]
    %v878 = vld [vmem:[#allocation8 + $0x374] sm:$0xff]
    %v879 = vld [vmem:[#allocation8 + $0x37c] sm:$0xf]
    %v880 = vld [vmem:[#allocation8 + $0x380] sm:$0xff]
    %v881 = vld [vmem:[#allocation8 + $0x388] sm:$0xff]
    %v882 = vld [vmem:[#allocation8 + $0x390] sm:$0xff]
    %v883 = vld [vmem:[#allocation8 + $0x398] sm:$0xf]
    %v884 = vld [vmem:[#allocation8 + $0x39c] sm:$0xff]
    %v885 = vld [vmem:[#allocation8 + $0x3a4] sm:$0xff]
    %v886 = vld [vmem:[#allocation8 + $0x3ac] sm:$0xff]
    %v887 = vld [vmem:[#allocation8 + $0x3b4] sm:$0xf]
    %v888 = vld [vmem:[#allocation8 + $0x3b8] sm:$0xff]
    %v889 = vld [vmem:[#allocation8 + $0x3c0] sm:$0xff]
    %v890 = vld [vmem:[#allocation8 + $0x3c8] sm:$0xff]
    %v891 = vld [vmem:[#allocation8 + $0x3d0] sm:$0xf]
    %v892 = vld [vmem:[#allocation8 + $0x3d4] sm:$0xff]
    %v893 = vld [vmem:[#allocation8 + $0x3dc] sm:$0xff]
    %v894 = vld [vmem:[#allocation8 + $0x3e4] sm:$0xff]
    %v895 = vld [vmem:[#allocation8 + $0x3ec] sm:$0xf]
    %v896 = vld [vmem:[#allocation8 + $0x3f0] sm:$0xff]
    %v897 = vld [vmem:[#allocation8 + $0x3f8] sm:$0xff]
    %v898 = vld [vmem:[#allocation8 + $0x400] sm:$0xff]
    %v899 = vld [vmem:[#allocation8 + $0x408] sm:$0xf]
    %v900 = vld [vmem:[#allocation8 + $0x40c] sm:$0xff]
    %v901 = vld [vmem:[#allocation8 + $0x414] sm:$0xff]
    %v902 = vld [vmem:[#allocation8 + $0x41c] sm:$0xff]
    %v903 = vld [vmem:[#allocation8 + $0x424] sm:$0xf]
    %v904 = vld [vmem:[#allocation8 + $0x428] sm:$0xff]
    %v905 = vld [vmem:[#allocation8 + $0x430] sm:$0xff]
    %v906 = vld [vmem:[#allocation8 + $0x438] sm:$0xff]
    %v907 = vld [vmem:[#allocation8 + $0x440] sm:$0xf]
    %v908 = vld [vmem:[#allocation8 + $0x444] sm:$0xff]
    %v909 = vld [vmem:[#allocation8 + $0x44c] sm:$0xff]
    %v910 = vld [vmem:[#allocation8 + $0x454] sm:$0xff]
    %v911 = vld [vmem:[#allocation8 + $0x45c] sm:$0xf]
    %v912 = vld [vmem:[#allocation8 + $0x460] sm:$0xff]
    %v913 = vld [vmem:[#allocation8 + $0x468] sm:$0xff]
    %v914 = vld [vmem:[#allocation8 + $0x470] sm:$0xff]
    %v915 = vld [vmem:[#allocation8 + $0x478] sm:$0xf]
    %v916 = vld [vmem:[#allocation8 + $0x47c] sm:$0xff]
    %v917 = vld [vmem:[#allocation8 + $0x484] sm:$0xff]
    %v918 = vld [vmem:[#allocation8 + $0x48c] sm:$0xff]
    %v919 = vld [vmem:[#allocation8 + $0x494] sm:$0xf]
    %v920 = vld [vmem:[#allocation8 + $0x498] sm:$0xff]
    %v921 = vld [vmem:[#allocation8 + $0x4a0] sm:$0xff]
    %v922 = vld [vmem:[#allocation8 + $0x4a8] sm:$0xff]
    %v923 = vld [vmem:[#allocation8 + $0x4b0] sm:$0xf]
    %v924 = vld [vmem:[#allocation8 + $0x4b4] sm:$0xff]
    %v925 = vld [vmem:[#allocation8 + $0x4bc] sm:$0xff]
    %v926 = vld [vmem:[#allocation8 + $0x4c4] sm:$0xff]
    %v927 = vld [vmem:[#allocation8 + $0x4cc] sm:$0xf]
    %v928 = vld [vmem:[#allocation8 + $0x4d0] sm:$0xff]
    %v929 = vld [vmem:[#allocation8 + $0x4d8] sm:$0xff]
    %v930 = vld [vmem:[#allocation8 + $0x4e0] sm:$0xff]
    %v931 = vld [vmem:[#allocation8 + $0x4e8] sm:$0xf]
    %v932 = vld [vmem:[#allocation8 + $0x4ec] sm:$0xff]
    %v933 = vld [vmem:[#allocation8 + $0x4f4] sm:$0xff]
    %v934 = vld [vmem:[#allocation8 + $0x4fc] sm:$0xff]
    %v935 = vld [vmem:[#allocation8 + $0x504] sm:$0xf]
    %v936 = vld [vmem:[#allocation8 + $0x508] sm:$0xff]
    %v937 = vld [vmem:[#allocation8 + $0x510] sm:$0xff]
    %v938 = vld [vmem:[#allocation8 + $0x518] sm:$0xff]
    %v939 = vld [vmem:[#allocation8 + $0x520] sm:$0xf]
    %v940 = vld [vmem:[#allocation8 + $0x524] sm:$0xff]
    %v941 = vld [vmem:[#allocation8 + $0x52c] sm:$0xff]
    %v942 = vld [vmem:[#allocation8 + $0x534] sm:$0xff]
    %v943 = vld [vmem:[#allocation8 + $0x53c] sm:$0xf]
    %v944 = vld [vmem:[#allocation8 + $0x540] sm:$0xff]
    %v945 = vld [vmem:[#allocation8 + $0x548] sm:$0xff]
    %v946 = vld [vmem:[#allocation8 + $0x550] sm:$0xff]
    %v947 = vld [vmem:[#allocation8 + $0x558] sm:$0xf]
    %v948 = vld [vmem:[#allocation8 + $0x55c] sm:$0xff]
    %v949 = vld [vmem:[#allocation8 + $0x564] sm:$0xff]
    %v950 = vld [vmem:[#allocation8 + $0x56c] sm:$0xff]
    %v951 = vld [vmem:[#allocation8 + $0x574] sm:$0xf]
    %v952 = vld [vmem:[#allocation8 + $0x578] sm:$0xff]
    %v953 = vld [vmem:[#allocation8 + $0x580] sm:$0xff]
    %v954 = vld [vmem:[#allocation8 + $0x588] sm:$0xff]
    %v955 = vld [vmem:[#allocation8 + $0x590] sm:$0xf]
    %v956 = vld [vmem:[#allocation8 + $0x594] sm:$0xff]
    %v957 = vld [vmem:[#allocation8 + $0x59c] sm:$0xff]
    %v958 = vld [vmem:[#allocation8 + $0x5a4] sm:$0xff]
    %v959 = vld [vmem:[#allocation8 + $0x5ac] sm:$0xf]
    %v960 = vld [vmem:[#allocation8 + $0x5b0] sm:$0xff]
    %v961 = vld [vmem:[#allocation8 + $0x5b8] sm:$0xff]
    %v962 = vld [vmem:[#allocation8 + $0x5c0] sm:$0xff]
    %v963 = vld [vmem:[#allocation8 + $0x5c8] sm:$0xf]
    %v964 = vld [vmem:[#allocation8 + $0x5cc] sm:$0xff]
    %v965 = vld [vmem:[#allocation8 + $0x5d4] sm:$0xff]
    %v966 = vld [vmem:[#allocation8 + $0x5dc] sm:$0xff]
    %v967 = vld [vmem:[#allocation8 + $0x5e4] sm:$0xf]
    %v968 = vld [vmem:[#allocation8 + $0x5e8] sm:$0xff]
    %v969 = vld [vmem:[#allocation8 + $0x5f0] sm:$0xff]
    %v970 = vld [vmem:[#allocation8 + $0x5f8] sm:$0xff]
    %v971 = vld [vmem:[#allocation8 + $0x600] sm:$0xf]
    %v972 = vld [vmem:[#allocation8 + $0x604] sm:$0xff]
    %v973 = vld [vmem:[#allocation8 + $0x60c] sm:$0xff]
    %v974 = vld [vmem:[#allocation8 + $0x614] sm:$0xff]
    %v975 = vld [vmem:[#allocation8 + $0x61c] sm:$0xf]
    %v976 = vld [vmem:[#allocation8 + $0x620] sm:$0xff]
    %v977 = vld [vmem:[#allocation8 + $0x628] sm:$0xff]
    %v978 = vld [vmem:[#allocation8 + $0x630] sm:$0xff]
    %v979 = vld [vmem:[#allocation8 + $0x638] sm:$0xf]
    %v980 = vld [vmem:[#allocation8 + $0x63c] sm:$0xff]
    %v981 = vld [vmem:[#allocation8 + $0x644] sm:$0xff]
    %v982 = vld [vmem:[#allocation8 + $0x64c] sm:$0xff]
    %v983 = vld [vmem:[#allocation8 + $0x654] sm:$0xf]
    %v984 = vld [vmem:[#allocation8 + $0x658] sm:$0xff]
    %v985 = vld [vmem:[#allocation8 + $0x660] sm:$0xff]
    %v986 = vld [vmem:[#allocation8 + $0x668] sm:$0xff]
    %v987 = vld [vmem:[#allocation8 + $0x670] sm:$0xf]
    %v988 = vld [vmem:[#allocation8 + $0x674] sm:$0xff]
    %v989 = vld [vmem:[#allocation8 + $0x67c] sm:$0xff]
    %v990 = vld [vmem:[#allocation8 + $0x684] sm:$0xff]
    %v991 = vld [vmem:[#allocation8 + $0x68c] sm:$0xf]
    %v992 = vld [vmem:[#allocation8 + $0x690] sm:$0xff]
    %v993 = vld [vmem:[#allocation8 + $0x698] sm:$0xff]
    %v994 = vld [vmem:[#allocation8 + $0x6a0] sm:$0xff]
    %v995 = vld [vmem:[#allocation8 + $0x6a8] sm:$0xf]
    %v996 = vld [vmem:[#allocation8 + $0x6ac] sm:$0xff]
    %v997 = vld [vmem:[#allocation8 + $0x6b4] sm:$0xff]
    %v998 = vld [vmem:[#allocation8 + $0x6bc] sm:$0xff]
    %v999 = vld [vmem:[#allocation8 + $0x6c4] sm:$0xf]
    %v1000 = vld [vmem:[#allocation8 + $0x6c8] sm:$0xff]
    %v1001 = vld [vmem:[#allocation8 + $0x6d0] sm:$0xff]
    %v1002 = vld [vmem:[#allocation8 + $0x6d8] sm:$0xff]
    %v1003 = vld [vmem:[#allocation8 + $0x6e0] sm:$0xf]
    %v1004 = vld [vmem:[#allocation8 + $0x6e4] sm:$0xff]
    %v1005 = vld [vmem:[#allocation8 + $0x6ec] sm:$0xff]
    %v1006 = vld [vmem:[#allocation8 + $0x6f4] sm:$0xff]
    %v1007 = vld [vmem:[#allocation8 + $0x6fc] sm:$0xf]
    %v1008 = vld [vmem:[%s6] sm:$0xff]
    %v1010 = vlaneseq
    %v1011 = vshrl.u32 %v1010, 7
    %v1012 = vsub.s32 0, %v1011
    %v1013 = vrot.slane %v1008, %v1012
    %v1014 = vlaneseq
    %v1015 = vshrl.u32 %v1014, 7
    %v1016 = vsub.s32 1, %v1015
    %v1017 = vrot.slane %v1008, %v1016
    %v1018 = vlaneseq
    %v1019 = vshrl.u32 %v1018, 7
    %v1020 = vsub.s32 2, %v1019
    %v1021 = vrot.slane %v1008, %v1020
    %v1022 = vlaneseq
    %v1023 = vshrl.u32 %v1022, 7
    %v1024 = vsub.s32 3, %v1023
    %v1025 = vrot.slane %v1008, %v1024
    %v1026 = vlaneseq
    %v1027 = vshrl.u32 %v1026, 7
    %v1028 = vsub.s32 4, %v1027
    %v1029 = vrot.slane %v1008, %v1028
    %v1030 = vlaneseq
    %v1031 = vshrl.u32 %v1030, 7
    %v1032 = vsub.s32 5, %v1031
    %v1033 = vrot.slane %v1008, %v1032
    %v1034 = vlaneseq
    %v1035 = vshrl.u32 %v1034, 7
    %v1036 = vsub.s32 6, %v1035
    %v1037 = vrot.slane %v1008, %v1036
    %v1301 = vunpack.c.l.b16 %v752
    %v1302 = vunpack.c.h.b16 %v752
    %v1303 = vunpack.c.l.b16 %v753
    %v1304 = vunpack.c.h.b16 %v753
    %v1305 = vunpack.c.l.b16 %v754
    %v1306 = vunpack.c.h.b16 %v754
    %v1307 = vunpack.c.l.b16 %v755
    %v1308 = vunpack.c.l.b16 %v756
    %v1309 = vunpack.c.h.b16 %v756
    %v1310 = vunpack.c.l.b16 %v757
    %v1311 = vunpack.c.h.b16 %v757
    %v1312 = vunpack.c.l.b16 %v758
    %v1313 = vunpack.c.h.b16 %v758
    %v1314 = vunpack.c.l.b16 %v759
    %v1315 = vunpack.c.l.b16 %v760
    %v1316 = vunpack.c.h.b16 %v760
    %v1317 = vunpack.c.l.b16 %v761
    %v1318 = vunpack.c.h.b16 %v761
    %v1319 = vunpack.c.l.b16 %v762
    %v1320 = vunpack.c.h.b16 %v762
    %v1321 = vunpack.c.l.b16 %v763
    %v1322 = vunpack.c.l.b16 %v764
    %v1323 = vunpack.c.h.b16 %v764
    %v1324 = vunpack.c.l.b16 %v765
    %v1325 = vunpack.c.h.b16 %v765
    %v1326 = vunpack.c.l.b16 %v766
    %v1327 = vunpack.c.h.b16 %v766
    %v1328 = vunpack.c.l.b16 %v767
    %v1329 = vunpack.c.l.b16 %v768
    %v1330 = vunpack.c.h.b16 %v768
    %v1331 = vunpack.c.l.b16 %v769
    %v1332 = vunpack.c.h.b16 %v769
    %v1333 = vunpack.c.l.b16 %v770
    %v1334 = vunpack.c.h.b16 %v770
    %v1335 = vunpack.c.l.b16 %v771
    %v1336 = vunpack.c.l.b16 %v772
    %v1337 = vunpack.c.h.b16 %v772
    %v1338 = vunpack.c.l.b16 %v773
    %v1339 = vunpack.c.h.b16 %v773
    %v1340 = vunpack.c.l.b16 %v774
    %v1341 = vunpack.c.h.b16 %v774
    %v1342 = vunpack.c.l.b16 %v775
    %v1343 = vunpack.c.l.b16 %v776
    %v1344 = vunpack.c.h.b16 %v776
    %v1345 = vunpack.c.l.b16 %v777
    %v1346 = vunpack.c.h.b16 %v777
    %v1347 = vunpack.c.l.b16 %v778
    %v1348 = vunpack.c.h.b16 %v778
    %v1349 = vunpack.c.l.b16 %v779
    %v1350 = vunpack.c.l.b16 %v780
    %v1351 = vunpack.c.h.b16 %v780
    %v1352 = vunpack.c.l.b16 %v781
    %v1353 = vunpack.c.h.b16 %v781
    %v1354 = vunpack.c.l.b16 %v782
    %v1355 = vunpack.c.h.b16 %v782
    %v1356 = vunpack.c.l.b16 %v783
    %v1357 = vunpack.c.l.b16 %v784
    %v1358 = vunpack.c.h.b16 %v784
    %v1359 = vunpack.c.l.b16 %v785
    %v1360 = vunpack.c.h.b16 %v785
    %v1361 = vunpack.c.l.b16 %v786
    %v1362 = vunpack.c.h.b16 %v786
    %v1363 = vunpack.c.l.b16 %v787
    %v1364 = vunpack.c.l.b16 %v788
    %v1365 = vunpack.c.h.b16 %v788
    %v1366 = vunpack.c.l.b16 %v789
    %v1367 = vunpack.c.h.b16 %v789
    %v1368 = vunpack.c.l.b16 %v790
    %v1369 = vunpack.c.h.b16 %v790
    %v1370 = vunpack.c.l.b16 %v791
    %v1371 = vunpack.c.l.b16 %v792
    %v1372 = vunpack.c.h.b16 %v792
    %v1373 = vunpack.c.l.b16 %v793
    %v1374 = vunpack.c.h.b16 %v793
    %v1375 = vunpack.c.l.b16 %v794
    %v1376 = vunpack.c.h.b16 %v794
    %v1377 = vunpack.c.l.b16 %v795
    %v1378 = vunpack.c.l.b16 %v796
    %v1379 = vunpack.c.h.b16 %v796
    %v1380 = vunpack.c.l.b16 %v797
    %v1381 = vunpack.c.h.b16 %v797
    %v1382 = vunpack.c.l.b16 %v798
    %v1383 = vunpack.c.h.b16 %v798
    %v1384 = vunpack.c.l.b16 %v799
    %v1385 = vunpack.c.l.b16 %v800
    %v1386 = vunpack.c.h.b16 %v800
    %v1387 = vunpack.c.l.b16 %v801
    %v1388 = vunpack.c.h.b16 %v801
    %v1389 = vunpack.c.l.b16 %v802
    %v1390 = vunpack.c.h.b16 %v802
    %v1391 = vunpack.c.l.b16 %v803
    %v1392 = vunpack.c.l.b16 %v804
    %v1393 = vunpack.c.h.b16 %v804
    %v1394 = vunpack.c.l.b16 %v805
    %v1395 = vunpack.c.h.b16 %v805
    %v1396 = vunpack.c.l.b16 %v806
    %v1397 = vunpack.c.h.b16 %v806
    %v1398 = vunpack.c.l.b16 %v807
    %v1399 = vunpack.c.l.b16 %v808
    %v1400 = vunpack.c.h.b16 %v808
    %v1401 = vunpack.c.l.b16 %v809
    %v1402 = vunpack.c.h.b16 %v809
    %v1403 = vunpack.c.l.b16 %v810
    %v1404 = vunpack.c.h.b16 %v810
    %v1405 = vunpack.c.l.b16 %v811
    %v1406 = vunpack.c.l.b16 %v812
    %v1407 = vunpack.c.h.b16 %v812
    %v1408 = vunpack.c.l.b16 %v813
    %v1409 = vunpack.c.h.b16 %v813
    %v1410 = vunpack.c.l.b16 %v814
    %v1411 = vunpack.c.h.b16 %v814
    %v1412 = vunpack.c.l.b16 %v815
    %v1413 = vunpack.c.l.b16 %v816
    %v1414 = vunpack.c.h.b16 %v816
    %v1415 = vunpack.c.l.b16 %v817
    %v1416 = vunpack.c.h.b16 %v817
    %v1417 = vunpack.c.l.b16 %v818
    %v1418 = vunpack.c.h.b16 %v818
    %v1419 = vunpack.c.l.b16 %v819
    %v1420 = vunpack.c.l.b16 %v820
    %v1421 = vunpack.c.h.b16 %v820
    %v1422 = vunpack.c.l.b16 %v821
    %v1423 = vunpack.c.h.b16 %v821
    %v1424 = vunpack.c.l.b16 %v822
    %v1425 = vunpack.c.h.b16 %v822
    %v1426 = vunpack.c.l.b16 %v823
    %v1427 = vunpack.c.l.b16 %v824
    %v1428 = vunpack.c.h.b16 %v824
    %v1429 = vunpack.c.l.b16 %v825
    %v1430 = vunpack.c.h.b16 %v825
    %v1431 = vunpack.c.l.b16 %v826
    %v1432 = vunpack.c.h.b16 %v826
    %v1433 = vunpack.c.l.b16 %v827
    %v1434 = vunpack.c.l.b16 %v828
    %v1435 = vunpack.c.h.b16 %v828
    %v1436 = vunpack.c.l.b16 %v829
    %v1437 = vunpack.c.h.b16 %v829
    %v1438 = vunpack.c.l.b16 %v830
    %v1439 = vunpack.c.h.b16 %v830
    %v1440 = vunpack.c.l.b16 %v831
    %v1441 = vunpack.c.l.b16 %v832
    %v1442 = vunpack.c.h.b16 %v832
    %v1443 = vunpack.c.l.b16 %v833
    %v1444 = vunpack.c.h.b16 %v833
    %v1445 = vunpack.c.l.b16 %v834
    %v1446 = vunpack.c.h.b16 %v834
    %v1447 = vunpack.c.l.b16 %v835
    %v1448 = vunpack.c.l.b16 %v836
    %v1449 = vunpack.c.h.b16 %v836
    %v1450 = vunpack.c.l.b16 %v837
    %v1451 = vunpack.c.h.b16 %v837
    %v1452 = vunpack.c.l.b16 %v838
    %v1453 = vunpack.c.h.b16 %v838
    %v1454 = vunpack.c.l.b16 %v839
    %v1455 = vunpack.c.l.b16 %v840
    %v1456 = vunpack.c.h.b16 %v840
    %v1457 = vunpack.c.l.b16 %v841
    %v1458 = vunpack.c.h.b16 %v841
    %v1459 = vunpack.c.l.b16 %v842
    %v1460 = vunpack.c.h.b16 %v842
    %v1461 = vunpack.c.l.b16 %v843
    %v1462 = vunpack.c.l.b16 %v844
    %v1463 = vunpack.c.h.b16 %v844
    %v1464 = vunpack.c.l.b16 %v845
    %v1465 = vunpack.c.h.b16 %v845
    %v1466 = vunpack.c.l.b16 %v846
    %v1467 = vunpack.c.h.b16 %v846
    %v1468 = vunpack.c.l.b16 %v847
    %v1469 = vunpack.c.l.b16 %v848
    %v1470 = vunpack.c.h.b16 %v848
    %v1471 = vunpack.c.l.b16 %v849
    %v1472 = vunpack.c.h.b16 %v849
    %v1473 = vunpack.c.l.b16 %v850
    %v1474 = vunpack.c.h.b16 %v850
    %v1475 = vunpack.c.l.b16 %v851
    %v1476 = vunpack.c.l.b16 %v852
    %v1477 = vunpack.c.h.b16 %v852
    %v1478 = vunpack.c.l.b16 %v853
    %v1479 = vunpack.c.h.b16 %v853
    %v1480 = vunpack.c.l.b16 %v854
    %v1481 = vunpack.c.h.b16 %v854
    %v1482 = vunpack.c.l.b16 %v855
    %v1483 = vunpack.c.l.b16 %v856
    %v1484 = vunpack.c.h.b16 %v856
    %v1485 = vunpack.c.l.b16 %v857
    %v1486 = vunpack.c.h.b16 %v857
    %v1487 = vunpack.c.l.b16 %v858
    %v1488 = vunpack.c.h.b16 %v858
    %v1489 = vunpack.c.l.b16 %v859
    %v1490 = vunpack.c.l.b16 %v860
    %v1491 = vunpack.c.h.b16 %v860
    %v1492 = vunpack.c.l.b16 %v861
    %v1493 = vunpack.c.h.b16 %v861
    %v1494 = vunpack.c.l.b16 %v862
    %v1495 = vunpack.c.h.b16 %v862
    %v1496 = vunpack.c.l.b16 %v863
    %v1497 = vunpack.c.l.b16 %v864
    %v1498 = vunpack.c.h.b16 %v864
    %v1499 = vunpack.c.l.b16 %v865
    %v1500 = vunpack.c.h.b16 %v865
    %v1501 = vunpack.c.l.b16 %v866
    %v1502 = vunpack.c.h.b16 %v866
    %v1503 = vunpack.c.l.b16 %v867
    %v1504 = vunpack.c.l.b16 %v868
    %v1505 = vunpack.c.h.b16 %v868
    %v1506 = vunpack.c.l.b16 %v869
    %v1507 = vunpack.c.h.b16 %v869
    %v1508 = vunpack.c.l.b16 %v870
    %v1509 = vunpack.c.h.b16 %v870
    %v1510 = vunpack.c.l.b16 %v871
    %v1511 = vunpack.c.l.b16 %v872
    %v1512 = vunpack.c.h.b16 %v872
    %v1513 = vunpack.c.l.b16 %v873
    %v1514 = vunpack.c.h.b16 %v873
    %v1515 = vunpack.c.l.b16 %v874
    %v1516 = vunpack.c.h.b16 %v874
    %v1517 = vunpack.c.l.b16 %v875
    %v1518 = vunpack.c.l.b16 %v876
    %v1519 = vunpack.c.h.b16 %v876
    %v1520 = vunpack.c.l.b16 %v877
    %v1521 = vunpack.c.h.b16 %v877
    %v1522 = vunpack.c.l.b16 %v878
    %v1523 = vunpack.c.h.b16 %v878
    %v1524 = vunpack.c.l.b16 %v879
    %v1525 = vunpack.c.l.b16 %v880
    %v1526 = vunpack.c.h.b16 %v880
    %v1527 = vunpack.c.l.b16 %v881
    %v1528 = vunpack.c.h.b16 %v881
    %v1529 = vunpack.c.l.b16 %v882
    %v1530 = vunpack.c.h.b16 %v882
    %v1531 = vunpack.c.l.b16 %v883
    %v1532 = vunpack.c.l.b16 %v884
    %v1533 = vunpack.c.h.b16 %v884
    %v1534 = vunpack.c.l.b16 %v885
    %v1535 = vunpack.c.h.b16 %v885
    %v1536 = vunpack.c.l.b16 %v886
    %v1537 = vunpack.c.h.b16 %v886
    %v1538 = vunpack.c.l.b16 %v887
    %v1539 = vunpack.c.l.b16 %v888
    %v1540 = vunpack.c.h.b16 %v888
    %v1541 = vunpack.c.l.b16 %v889
    %v1542 = vunpack.c.h.b16 %v889
    %v1543 = vunpack.c.l.b16 %v890
    %v1544 = vunpack.c.h.b16 %v890
    %v1545 = vunpack.c.l.b16 %v891
    %v1546 = vunpack.c.l.b16 %v892
    %v1547 = vunpack.c.h.b16 %v892
    %v1548 = vunpack.c.l.b16 %v893
    %v1549 = vunpack.c.h.b16 %v893
    %v1550 = vunpack.c.l.b16 %v894
    %v1551 = vunpack.c.h.b16 %v894
    %v1552 = vunpack.c.l.b16 %v895
    %v1553 = vunpack.c.l.b16 %v896
    %v1554 = vunpack.c.h.b16 %v896
    %v1555 = vunpack.c.l.b16 %v897
    %v1556 = vunpack.c.h.b16 %v897
    %v1557 = vunpack.c.l.b16 %v898
    %v1558 = vunpack.c.h.b16 %v898
    %v1559 = vunpack.c.l.b16 %v899
    %v1560 = vunpack.c.l.b16 %v900
    %v1561 = vunpack.c.h.b16 %v900
    %v1562 = vunpack.c.l.b16 %v901
    %v1563 = vunpack.c.h.b16 %v901
    %v1564 = vunpack.c.l.b16 %v902
    %v1565 = vunpack.c.h.b16 %v902
    %v1566 = vunpack.c.l.b16 %v903
    %v1567 = vunpack.c.l.b16 %v904
    %v1568 = vunpack.c.h.b16 %v904
    %v1569 = vunpack.c.l.b16 %v905
    %v1570 = vunpack.c.h.b16 %v905
    %v1571 = vunpack.c.l.b16 %v906
    %v1572 = vunpack.c.h.b16 %v906
    %v1573 = vunpack.c.l.b16 %v907
    %v1574 = vunpack.c.l.b16 %v908
    %v1575 = vunpack.c.h.b16 %v908
    %v1576 = vunpack.c.l.b16 %v909
    %v1577 = vunpack.c.h.b16 %v909
    %v1578 = vunpack.c.l.b16 %v910
    %v1579 = vunpack.c.h.b16 %v910
    %v1580 = vunpack.c.l.b16 %v911
    %v1581 = vunpack.c.l.b16 %v912
    %v1582 = vunpack.c.h.b16 %v912
    %v1583 = vunpack.c.l.b16 %v913
    %v1584 = vunpack.c.h.b16 %v913
    %v1585 = vunpack.c.l.b16 %v914
    %v1586 = vunpack.c.h.b16 %v914
    %v1587 = vunpack.c.l.b16 %v915
    %v1588 = vunpack.c.l.b16 %v916
    %v1589 = vunpack.c.h.b16 %v916
    %v1590 = vunpack.c.l.b16 %v917
    %v1591 = vunpack.c.h.b16 %v917
    %v1592 = vunpack.c.l.b16 %v918
    %v1593 = vunpack.c.h.b16 %v918
    %v1594 = vunpack.c.l.b16 %v919
    %v1595 = vunpack.c.l.b16 %v920
    %v1596 = vunpack.c.h.b16 %v920
    %v1597 = vunpack.c.l.b16 %v921
    %v1598 = vunpack.c.h.b16 %v921
    %v1599 = vunpack.c.l.b16 %v922
    %v1600 = vunpack.c.h.b16 %v922
    %v1601 = vunpack.c.l.b16 %v923
    %v1602 = vunpack.c.l.b16 %v924
    %v1603 = vunpack.c.h.b16 %v924
    %v1604 = vunpack.c.l.b16 %v925
    %v1605 = vunpack.c.h.b16 %v925
    %v1606 = vunpack.c.l.b16 %v926
    %v1607 = vunpack.c.h.b16 %v926
    %v1608 = vunpack.c.l.b16 %v927
    %v1609 = vunpack.c.l.b16 %v928
    %v1610 = vunpack.c.h.b16 %v928
    %v1611 = vunpack.c.l.b16 %v929
    %v1612 = vunpack.c.h.b16 %v929
    %v1613 = vunpack.c.l.b16 %v930
    %v1614 = vunpack.c.h.b16 %v930
    %v1615 = vunpack.c.l.b16 %v931
    %v1616 = vunpack.c.l.b16 %v932
    %v1617 = vunpack.c.h.b16 %v932
    %v1618 = vunpack.c.l.b16 %v933
    %v1619 = vunpack.c.h.b16 %v933
    %v1620 = vunpack.c.l.b16 %v934
    %v1621 = vunpack.c.h.b16 %v934
    %v1622 = vunpack.c.l.b16 %v935
    %v1623 = vunpack.c.l.b16 %v936
    %v1624 = vunpack.c.h.b16 %v936
    %v1625 = vunpack.c.l.b16 %v937
    %v1626 = vunpack.c.h.b16 %v937
    %v1627 = vunpack.c.l.b16 %v938
    %v1628 = vunpack.c.h.b16 %v938
    %v1629 = vunpack.c.l.b16 %v939
    %v1630 = vunpack.c.l.b16 %v940
    %v1631 = vunpack.c.h.b16 %v940
    %v1632 = vunpack.c.l.b16 %v941
    %v1633 = vunpack.c.h.b16 %v941
    %v1634 = vunpack.c.l.b16 %v942
    %v1635 = vunpack.c.h.b16 %v942
    %v1636 = vunpack.c.l.b16 %v943
    %v1637 = vunpack.c.l.b16 %v944
    %v1638 = vunpack.c.h.b16 %v944
    %v1639 = vunpack.c.l.b16 %v945
    %v1640 = vunpack.c.h.b16 %v945
    %v1641 = vunpack.c.l.b16 %v946
    %v1642 = vunpack.c.h.b16 %v946
    %v1643 = vunpack.c.l.b16 %v947
    %v1644 = vunpack.c.l.b16 %v948
    %v1645 = vunpack.c.h.b16 %v948
    %v1646 = vunpack.c.l.b16 %v949
    %v1647 = vunpack.c.h.b16 %v949
    %v1648 = vunpack.c.l.b16 %v950
    %v1649 = vunpack.c.h.b16 %v950
    %v1650 = vunpack.c.l.b16 %v951
    %v1651 = vunpack.c.l.b16 %v952
    %v1652 = vunpack.c.h.b16 %v952
    %v1653 = vunpack.c.l.b16 %v953
    %v1654 = vunpack.c.h.b16 %v953
    %v1655 = vunpack.c.l.b16 %v954
    %v1656 = vunpack.c.h.b16 %v954
    %v1657 = vunpack.c.l.b16 %v955
    %v1658 = vunpack.c.l.b16 %v956
    %v1659 = vunpack.c.h.b16 %v956
    %v1660 = vunpack.c.l.b16 %v957
    %v1661 = vunpack.c.h.b16 %v957
    %v1662 = vunpack.c.l.b16 %v958
    %v1663 = vunpack.c.h.b16 %v958
    %v1664 = vunpack.c.l.b16 %v959
    %v1665 = vunpack.c.l.b16 %v960
    %v1666 = vunpack.c.h.b16 %v960
    %v1667 = vunpack.c.l.b16 %v961
    %v1668 = vunpack.c.h.b16 %v961
    %v1669 = vunpack.c.l.b16 %v962
    %v1670 = vunpack.c.h.b16 %v962
    %v1671 = vunpack.c.l.b16 %v963
    %v1672 = vunpack.c.l.b16 %v964
    %v1673 = vunpack.c.h.b16 %v964
    %v1674 = vunpack.c.l.b16 %v965
    %v1675 = vunpack.c.h.b16 %v965
    %v1676 = vunpack.c.l.b16 %v966
    %v1677 = vunpack.c.h.b16 %v966
    %v1678 = vunpack.c.l.b16 %v967
    %v1679 = vunpack.c.l.b16 %v968
    %v1680 = vunpack.c.h.b16 %v968
    %v1681 = vunpack.c.l.b16 %v969
    %v1682 = vunpack.c.h.b16 %v969
    %v1683 = vunpack.c.l.b16 %v970
    %v1684 = vunpack.c.h.b16 %v970
    %v1685 = vunpack.c.l.b16 %v971
    %v1686 = vunpack.c.l.b16 %v972
    %v1687 = vunpack.c.h.b16 %v972
    %v1688 = vunpack.c.l.b16 %v973
    %v1689 = vunpack.c.h.b16 %v973
    %v1690 = vunpack.c.l.b16 %v974
    %v1691 = vunpack.c.h.b16 %v974
    %v1692 = vunpack.c.l.b16 %v975
    %v1693 = vunpack.c.l.b16 %v976
    %v1694 = vunpack.c.h.b16 %v976
    %v1695 = vunpack.c.l.b16 %v977
    %v1696 = vunpack.c.h.b16 %v977
    %v1697 = vunpack.c.l.b16 %v978
    %v1698 = vunpack.c.h.b16 %v978
    %v1699 = vunpack.c.l.b16 %v979
    %v1700 = vunpack.c.l.b16 %v980
    %v1701 = vunpack.c.h.b16 %v980
    %v1702 = vunpack.c.l.b16 %v981
    %v1703 = vunpack.c.h.b16 %v981
    %v1704 = vunpack.c.l.b16 %v982
    %v1705 = vunpack.c.h.b16 %v982
    %v1706 = vunpack.c.l.b16 %v983
    %v1707 = vunpack.c.l.b16 %v984
    %v1708 = vunpack.c.h.b16 %v984
    %v1709 = vunpack.c.l.b16 %v985
    %v1710 = vunpack.c.h.b16 %v985
    %v1711 = vunpack.c.l.b16 %v986
    %v1712 = vunpack.c.h.b16 %v986
    %v1713 = vunpack.c.l.b16 %v987
    %v1714 = vunpack.c.l.b16 %v988
    %v1715 = vunpack.c.h.b16 %v988
    %v1716 = vunpack.c.l.b16 %v989
    %v1717 = vunpack.c.h.b16 %v989
    %v1718 = vunpack.c.l.b16 %v990
    %v1719 = vunpack.c.h.b16 %v990
    %v1720 = vunpack.c.l.b16 %v991
    %v1721 = vunpack.c.l.b16 %v992
    %v1722 = vunpack.c.h.b16 %v992
    %v1723 = vunpack.c.l.b16 %v993
    %v1724 = vunpack.c.h.b16 %v993
    %v1725 = vunpack.c.l.b16 %v994
    %v1726 = vunpack.c.h.b16 %v994
    %v1727 = vunpack.c.l.b16 %v995
    %v1728 = vunpack.c.l.b16 %v996
    %v1729 = vunpack.c.h.b16 %v996
    %v1730 = vunpack.c.l.b16 %v997
    %v1731 = vunpack.c.h.b16 %v997
    %v1732 = vunpack.c.l.b16 %v998
    %v1733 = vunpack.c.h.b16 %v998
    %v1734 = vunpack.c.l.b16 %v999
    %v1735 = vunpack.c.l.b16 %v1000
    %v1736 = vunpack.c.h.b16 %v1000
    %v1737 = vunpack.c.l.b16 %v1001
    %v1738 = vunpack.c.h.b16 %v1001
    %v1739 = vunpack.c.l.b16 %v1002
    %v1740 = vunpack.c.h.b16 %v1002
    %v1741 = vunpack.c.l.b16 %v1003
    %v1742 = vunpack.c.l.b16 %v1004
    %v1743 = vunpack.c.h.b16 %v1004
    %v1744 = vunpack.c.l.b16 %v1005
    %v1745 = vunpack.c.h.b16 %v1005
    %v1746 = vunpack.c.l.b16 %v1006
    %v1747 = vunpack.c.h.b16 %v1006
    %v1748 = vunpack.c.l.b16 %v1007
    %v1749 = vpack.c.b16 %v1308, %v1301
    %v1750 = vpack.c.b16 %v1309, %v1302
    %v1751 = vpack.c.b16 %v1310, %v1303
    %v1752 = vpack.c.b16 %v1311, %v1304
    %v1753 = vpack.c.b16 %v1312, %v1305
    %v1754 = vpack.c.b16 %v1313, %v1306
    %v1755 = vpack.c.b16 %v1314, %v1307
    %v1756 = vpack.c.b16 %v1322, %v1315
    %v1757 = vpack.c.b16 %v1323, %v1316
    %v1758 = vpack.c.b16 %v1324, %v1317
    %v1759 = vpack.c.b16 %v1325, %v1318
    %v1760 = vpack.c.b16 %v1326, %v1319
    %v1761 = vpack.c.b16 %v1327, %v1320
    %v1762 = vpack.c.b16 %v1328, %v1321
    %v1763 = vpack.c.b16 %v1336, %v1329
    %v1764 = vpack.c.b16 %v1337, %v1330
    %v1765 = vpack.c.b16 %v1338, %v1331
    %v1766 = vpack.c.b16 %v1339, %v1332
    %v1767 = vpack.c.b16 %v1340, %v1333
    %v1768 = vpack.c.b16 %v1341, %v1334
    %v1769 = vpack.c.b16 %v1342, %v1335
    %v1770 = vpack.c.b16 %v1350, %v1343
    %v1771 = vpack.c.b16 %v1351, %v1344
    %v1772 = vpack.c.b16 %v1352, %v1345
    %v1773 = vpack.c.b16 %v1353, %v1346
    %v1774 = vpack.c.b16 %v1354, %v1347
    %v1775 = vpack.c.b16 %v1355, %v1348
    %v1776 = vpack.c.b16 %v1356, %v1349
    %v1777 = vpack.c.b16 %v1364, %v1357
    %v1778 = vpack.c.b16 %v1365, %v1358
    %v1779 = vpack.c.b16 %v1366, %v1359
    %v1780 = vpack.c.b16 %v1367, %v1360
    %v1781 = vpack.c.b16 %v1368, %v1361
    %v1782 = vpack.c.b16 %v1369, %v1362
    %v1783 = vpack.c.b16 %v1370, %v1363
    %v1784 = vpack.c.b16 %v1378, %v1371
    %v1785 = vpack.c.b16 %v1379, %v1372
    %v1786 = vpack.c.b16 %v1380, %v1373
    %v1787 = vpack.c.b16 %v1381, %v1374
    %v1788 = vpack.c.b16 %v1382, %v1375
    %v1789 = vpack.c.b16 %v1383, %v1376
    %v1790 = vpack.c.b16 %v1384, %v1377
    %v1791 = vpack.c.b16 %v1392, %v1385
    %v1792 = vpack.c.b16 %v1393, %v1386
    %v1793 = vpack.c.b16 %v1394, %v1387
    %v1794 = vpack.c.b16 %v1395, %v1388
    %v1795 = vpack.c.b16 %v1396, %v1389
    %v1796 = vpack.c.b16 %v1397, %v1390
    %v1797 = vpack.c.b16 %v1398, %v1391
    %v1798 = vpack.c.b16 %v1406, %v1399
    %v1799 = vpack.c.b16 %v1407, %v1400
    %v1800 = vpack.c.b16 %v1408, %v1401
    %v1801 = vpack.c.b16 %v1409, %v1402
    %v1802 = vpack.c.b16 %v1410, %v1403
    %v1803 = vpack.c.b16 %v1411, %v1404
    %v1804 = vpack.c.b16 %v1412, %v1405
    %v1805 = vpack.c.b16 %v1420, %v1413
    %v1806 = vpack.c.b16 %v1421, %v1414
    %v1807 = vpack.c.b16 %v1422, %v1415
    %v1808 = vpack.c.b16 %v1423, %v1416
    %v1809 = vpack.c.b16 %v1424, %v1417
    %v1810 = vpack.c.b16 %v1425, %v1418
    %v1811 = vpack.c.b16 %v1426, %v1419
    %v1812 = vpack.c.b16 %v1434, %v1427
    %v1813 = vpack.c.b16 %v1435, %v1428
    %v1814 = vpack.c.b16 %v1436, %v1429
    %v1815 = vpack.c.b16 %v1437, %v1430
    %v1816 = vpack.c.b16 %v1438, %v1431
    %v1817 = vpack.c.b16 %v1439, %v1432
    %v1818 = vpack.c.b16 %v1440, %v1433
    %v1819 = vpack.c.b16 %v1448, %v1441
    %v1820 = vpack.c.b16 %v1449, %v1442
    %v1821 = vpack.c.b16 %v1450, %v1443
    %v1822 = vpack.c.b16 %v1451, %v1444
    %v1823 = vpack.c.b16 %v1452, %v1445
    %v1824 = vpack.c.b16 %v1453, %v1446
    %v1825 = vpack.c.b16 %v1454, %v1447
    %v1826 = vpack.c.b16 %v1462, %v1455
    %v1827 = vpack.c.b16 %v1463, %v1456
    %v1828 = vpack.c.b16 %v1464, %v1457
    %v1829 = vpack.c.b16 %v1465, %v1458
    %v1830 = vpack.c.b16 %v1466, %v1459
    %v1831 = vpack.c.b16 %v1467, %v1460
    %v1832 = vpack.c.b16 %v1468, %v1461
    %v1833 = vpack.c.b16 %v1476, %v1469
    %v1834 = vpack.c.b16 %v1477, %v1470
    %v1835 = vpack.c.b16 %v1478, %v1471
    %v1836 = vpack.c.b16 %v1479, %v1472
    %v1837 = vpack.c.b16 %v1480, %v1473
    %v1838 = vpack.c.b16 %v1481, %v1474
    %v1839 = vpack.c.b16 %v1482, %v1475
    %v1840 = vpack.c.b16 %v1490, %v1483
    %v1841 = vpack.c.b16 %v1491, %v1484
    %v1842 = vpack.c.b16 %v1492, %v1485
    %v1843 = vpack.c.b16 %v1493, %v1486
    %v1844 = vpack.c.b16 %v1494, %v1487
    %v1845 = vpack.c.b16 %v1495, %v1488
    %v1846 = vpack.c.b16 %v1496, %v1489
    %v1847 = vpack.c.b16 %v1504, %v1497
    %v1848 = vpack.c.b16 %v1505, %v1498
    %v1849 = vpack.c.b16 %v1506, %v1499
    %v1850 = vpack.c.b16 %v1507, %v1500
    %v1851 = vpack.c.b16 %v1508, %v1501
    %v1852 = vpack.c.b16 %v1509, %v1502
    %v1853 = vpack.c.b16 %v1510, %v1503
    %v1854 = vpack.c.b16 %v1518, %v1511
    %v1855 = vpack.c.b16 %v1519, %v1512
    %v1856 = vpack.c.b16 %v1520, %v1513
    %v1857 = vpack.c.b16 %v1521, %v1514
    %v1858 = vpack.c.b16 %v1522, %v1515
    %v1859 = vpack.c.b16 %v1523, %v1516
    %v1860 = vpack.c.b16 %v1524, %v1517
    %v1861 = vpack.c.b16 %v1532, %v1525
    %v1862 = vpack.c.b16 %v1533, %v1526
    %v1863 = vpack.c.b16 %v1534, %v1527
    %v1864 = vpack.c.b16 %v1535, %v1528
    %v1865 = vpack.c.b16 %v1536, %v1529
    %v1866 = vpack.c.b16 %v1537, %v1530
    %v1867 = vpack.c.b16 %v1538, %v1531
    %v1868 = vpack.c.b16 %v1546, %v1539
    %v1869 = vpack.c.b16 %v1547, %v1540
    %v1870 = vpack.c.b16 %v1548, %v1541
    %v1871 = vpack.c.b16 %v1549, %v1542
    %v1872 = vpack.c.b16 %v1550, %v1543
    %v1873 = vpack.c.b16 %v1551, %v1544
    %v1874 = vpack.c.b16 %v1552, %v1545
    %v1875 = vpack.c.b16 %v1560, %v1553
    %v1876 = vpack.c.b16 %v1561, %v1554
    %v1877 = vpack.c.b16 %v1562, %v1555
    %v1878 = vpack.c.b16 %v1563, %v1556
    %v1879 = vpack.c.b16 %v1564, %v1557
    %v1880 = vpack.c.b16 %v1565, %v1558
    %v1881 = vpack.c.b16 %v1566, %v1559
    %v1882 = vpack.c.b16 %v1574, %v1567
    %v1883 = vpack.c.b16 %v1575, %v1568
    %v1884 = vpack.c.b16 %v1576, %v1569
    %v1885 = vpack.c.b16 %v1577, %v1570
    %v1886 = vpack.c.b16 %v1578, %v1571
    %v1887 = vpack.c.b16 %v1579, %v1572
    %v1888 = vpack.c.b16 %v1580, %v1573
    %v1889 = vpack.c.b16 %v1588, %v1581
    %v1890 = vpack.c.b16 %v1589, %v1582
    %v1891 = vpack.c.b16 %v1590, %v1583
    %v1892 = vpack.c.b16 %v1591, %v1584
    %v1893 = vpack.c.b16 %v1592, %v1585
    %v1894 = vpack.c.b16 %v1593, %v1586
    %v1895 = vpack.c.b16 %v1594, %v1587
    %v1896 = vpack.c.b16 %v1602, %v1595
    %v1897 = vpack.c.b16 %v1603, %v1596
    %v1898 = vpack.c.b16 %v1604, %v1597
    %v1899 = vpack.c.b16 %v1605, %v1598
    %v1900 = vpack.c.b16 %v1606, %v1599
    %v1901 = vpack.c.b16 %v1607, %v1600
    %v1902 = vpack.c.b16 %v1608, %v1601
    %v1903 = vpack.c.b16 %v1616, %v1609
    %v1904 = vpack.c.b16 %v1617, %v1610
    %v1905 = vpack.c.b16 %v1618, %v1611
    %v1906 = vpack.c.b16 %v1619, %v1612
    %v1907 = vpack.c.b16 %v1620, %v1613
    %v1908 = vpack.c.b16 %v1621, %v1614
    %v1909 = vpack.c.b16 %v1622, %v1615
    %v1910 = vpack.c.b16 %v1630, %v1623
    %v1911 = vpack.c.b16 %v1631, %v1624
    %v1912 = vpack.c.b16 %v1632, %v1625
    %v1913 = vpack.c.b16 %v1633, %v1626
    %v1914 = vpack.c.b16 %v1634, %v1627
    %v1915 = vpack.c.b16 %v1635, %v1628
    %v1916 = vpack.c.b16 %v1636, %v1629
    %v1917 = vpack.c.b16 %v1644, %v1637
    %v1918 = vpack.c.b16 %v1645, %v1638
    %v1919 = vpack.c.b16 %v1646, %v1639
    %v1920 = vpack.c.b16 %v1647, %v1640
    %v1921 = vpack.c.b16 %v1648, %v1641
    %v1922 = vpack.c.b16 %v1649, %v1642
    %v1923 = vpack.c.b16 %v1650, %v1643
    %v1924 = vpack.c.b16 %v1658, %v1651
    %v1925 = vpack.c.b16 %v1659, %v1652
    %v1926 = vpack.c.b16 %v1660, %v1653
    %v1927 = vpack.c.b16 %v1661, %v1654
    %v1928 = vpack.c.b16 %v1662, %v1655
    %v1929 = vpack.c.b16 %v1663, %v1656
    %v1930 = vpack.c.b16 %v1664, %v1657
    %v1931 = vpack.c.b16 %v1672, %v1665
    %v1932 = vpack.c.b16 %v1673, %v1666
    %v1933 = vpack.c.b16 %v1674, %v1667
    %v1934 = vpack.c.b16 %v1675, %v1668
    %v1935 = vpack.c.b16 %v1676, %v1669
    %v1936 = vpack.c.b16 %v1677, %v1670
    %v1937 = vpack.c.b16 %v1678, %v1671
    %v1938 = vpack.c.b16 %v1686, %v1679
    %v1939 = vpack.c.b16 %v1687, %v1680
    %v1940 = vpack.c.b16 %v1688, %v1681
    %v1941 = vpack.c.b16 %v1689, %v1682
    %v1942 = vpack.c.b16 %v1690, %v1683
    %v1943 = vpack.c.b16 %v1691, %v1684
    %v1944 = vpack.c.b16 %v1692, %v1685
    %v1945 = vpack.c.b16 %v1700, %v1693
    %v1946 = vpack.c.b16 %v1701, %v1694
    %v1947 = vpack.c.b16 %v1702, %v1695
    %v1948 = vpack.c.b16 %v1703, %v1696
    %v1949 = vpack.c.b16 %v1704, %v1697
    %v1950 = vpack.c.b16 %v1705, %v1698
    %v1951 = vpack.c.b16 %v1706, %v1699
    %v1952 = vpack.c.b16 %v1714, %v1707
    %v1953 = vpack.c.b16 %v1715, %v1708
    %v1954 = vpack.c.b16 %v1716, %v1709
    %v1955 = vpack.c.b16 %v1717, %v1710
    %v1956 = vpack.c.b16 %v1718, %v1711
    %v1957 = vpack.c.b16 %v1719, %v1712
    %v1958 = vpack.c.b16 %v1720, %v1713
    %v1959 = vpack.c.b16 %v1728, %v1721
    %v1960 = vpack.c.b16 %v1729, %v1722
    %v1961 = vpack.c.b16 %v1730, %v1723
    %v1962 = vpack.c.b16 %v1731, %v1724
    %v1963 = vpack.c.b16 %v1732, %v1725
    %v1964 = vpack.c.b16 %v1733, %v1726
    %v1965 = vpack.c.b16 %v1734, %v1727
    %v1966 = vpack.c.b16 %v1742, %v1735
    %v1967 = vpack.c.b16 %v1743, %v1736
    %v1968 = vpack.c.b16 %v1744, %v1737
    %v1969 = vpack.c.b16 %v1745, %v1738
    %v1970 = vpack.c.b16 %v1746, %v1739
    %v1971 = vpack.c.b16 %v1747, %v1740
    %v1972 = vpack.c.b16 %v1748, %v1741
    %2197 = vmatprep.subr.bf16.mxu0 %v1750
    %2198 = vmatpush1.bf16.msra.mxu0 %v1749
    %2199 = vmatprep.subr.bf16.mxu0 %v1757
    %2200 = vmatpush1.bf16.msra.mxu0 %v1756
    %2201 = vmatprep.subr.bf16.mxu0 %v1764
    %2202 = vmatpush1.bf16.msra.mxu0 %v1763
    %2203 = vmatprep.subr.bf16.mxu0 %v1771
    %2204 = vmatpush1.bf16.msra.mxu0 %v1770
    %2205 = vmatprep.subr.bf16.mxu0 %v1778
    %2206 = vmatpush1.bf16.msra.mxu0 %v1777
    %2207 = vmatprep.subr.bf16.mxu0 %v1785
    %2208 = vmatpush1.bf16.msra.mxu0 %v1784
    %2209 = vmatprep.subr.bf16.mxu0 %v1792
    %2210 = vmatpush1.bf16.msra.mxu0 %v1791
    %2211 = vmatprep.subr.bf16.mxu0 %v1799
    %2212 = vmatpush1.bf16.msra.mxu0 %v1798
    %2213 = vmatprep.subr.bf16.mxu0 %v1806
    %2214 = vmatpush1.bf16.msra.mxu0 %v1805
    %2215 = vmatprep.subr.bf16.mxu0 %v1813
    %2216 = vmatpush1.bf16.msra.mxu0 %v1812
    %2217 = vmatprep.subr.bf16.mxu0 %v1820
    %2218 = vmatpush1.bf16.msra.mxu0 %v1819
    %2219 = vmatprep.subr.bf16.mxu0 %v1827
    %2220 = vmatpush1.bf16.msra.mxu0 %v1826
    %2221 = vmatprep.subr.bf16.mxu0 %v1834
    %2222 = vmatpush1.bf16.msra.mxu0 %v1833
    %2223 = vmatprep.subr.bf16.mxu0 %v1841
    %2224 = vmatpush1.bf16.msra.mxu0 %v1840
    %2225 = vmatprep.subr.bf16.mxu0 %v1848
    %2226 = vmatpush1.bf16.msra.mxu0 %v1847
    %2227 = vmatprep.subr.bf16.mxu0 %v1855
    %2228 = vmatpush1.bf16.msra.mxu0 %v1854
    %2229 = vmatprep.mubr.bf16.mxu0 %v749
    %2230 = vmatmul.mubr.bf16.gmra.mrb[0].mxu0 %v748
    %v2231 = vpop.f32.mrb[0].mxu0
    %v2232 = vadd.f32 %v1013, %v2231
    %v2233 = vpop.f32.mrb[0].mxu0
    %v2234 = vadd.f32 %v1017, %v2233
    %v2235 = vpop.f32.mrb[0].mxu0
    %v2236 = vadd.f32 %v1013, %v2235
    %v2237 = vpop.f32.mrb[0].mxu0
    %v2238 = vadd.f32 %v1017, %v2237
    %2239 = vdwg.mxu0
    %2240 = vmatprep.subr.bf16.mxu0 %v1862
    %2241 = vmatpush1.bf16.msra.mxu0 %v1861
    %2242 = vmatprep.subr.bf16.mxu0 %v1869
    %2243 = vmatpush1.bf16.msra.mxu0 %v1868
    %2244 = vmatprep.subr.bf16.mxu0 %v1876
    %2245 = vmatpush1.bf16.msra.mxu0 %v1875
    %2246 = vmatprep.subr.bf16.mxu0 %v1883
    %2247 = vmatpush1.bf16.msra.mxu0 %v1882
    %2248 = vmatprep.subr.bf16.mxu0 %v1890
    %2249 = vmatpush1.bf16.msra.mxu0 %v1889
    %2250 = vmatprep.subr.bf16.mxu0 %v1897
    %2251 = vmatpush1.bf16.msra.mxu0 %v1896
    %2252 = vmatprep.subr.bf16.mxu0 %v1904
    %2253 = vmatpush1.bf16.msra.mxu0 %v1903
    %2254 = vmatprep.subr.bf16.mxu0 %v1911
    %2255 = vmatpush1.bf16.msra.mxu0 %v1910
    %2256 = vmatprep.subr.bf16.mxu0 %v1918
    %2257 = vmatpush1.bf16.msra.mxu0 %v1917
    %2258 = vmatprep.subr.bf16.mxu0 %v1925
    %2259 = vmatpush1.bf16.msra.mxu0 %v1924
    %2260 = vmatprep.subr.bf16.mxu0 %v1932
    %2261 = vmatpush1.bf16.msra.mxu0 %v1931
    %2262 = vmatprep.subr.bf16.mxu0 %v1939
    %2263 = vmatpush1.bf16.msra.mxu0 %v1938
    %2264 = vmatprep.subr.bf16.mxu0 %v1946
    %2265 = vmatpush1.bf16.msra.mxu0 %v1945
    %2266 = vmatprep.subr.bf16.mxu0 %v1953
    %2267 = vmatpush1.bf16.msra.mxu0 %v1952
    %2268 = vmatprep.subr.bf16.mxu0 %v1960
    %2269 = vmatpush1.bf16.msra.mxu0 %v1959
    %2270 = vmatprep.subr.bf16.mxu0 %v1967
    %2271 = vmatpush1.bf16.msra.mxu0 %v1966
    %2272 = vmatprep.mubr.bf16.mxu0 %v751
    %2273 = vmatmul.mubr.bf16.gmra.mrb[0].mxu0 %v750
    %v2274 = vpop.f32.mrb[0].mxu0
    %v2275 = vadd.f32 %v2232, %v2274
    %v2276 = vpop.f32.mrb[0].mxu0
    %v2277 = vadd.f32 %v2234, %v2276
    %v2278 = vpop.f32.mrb[0].mxu0
    %v2279 = vadd.f32 %v2236, %v2278
    %v2280 = vpop.f32.mrb[0].mxu0
    %v2281 = vadd.f32 %v2238, %v2280
    %2282 = vdwg.mxu0
    %2283 = vmatprep.subr.bf16.mxu0 %v1752
    %2284 = vmatpush1.bf16.msra.mxu0 %v1751
    %2285 = vmatprep.subr.bf16.mxu0 %v1759
    %2286 = vmatpush1.bf16.msra.mxu0 %v1758
    %2287 = vmatprep.subr.bf16.mxu0 %v1766
    %2288 = vmatpush1.bf16.msra.mxu0 %v1765
    %2289 = vmatprep.subr.bf16.mxu0 %v1773
    %2290 = vmatpush1.bf16.msra.mxu0 %v1772
    %2291 = vmatprep.subr.bf16.mxu0 %v1780
    %2292 = vmatpush1.bf16.msra.mxu0 %v1779
    %2293 = vmatprep.subr.bf16.mxu0 %v1787
    %2294 = vmatpush1.bf16.msra.mxu0 %v1786
    %2295 = vmatprep.subr.bf16.mxu0 %v1794
    %2296 = vmatpush1.bf16.msra.mxu0 %v1793
    %2297 = vmatprep.subr.bf16.mxu0 %v1801
    %2298 = vmatpush1.bf16.msra.mxu0 %v1800
    %2299 = vmatprep.subr.bf16.mxu0 %v1808
    %2300 = vmatpush1.bf16.msra.mxu0 %v1807
    %2301 = vmatprep.subr.bf16.mxu0 %v1815
    %2302 = vmatpush1.bf16.msra.mxu0 %v1814
    %2303 = vmatprep.subr.bf16.mxu0 %v1822
    %2304 = vmatpush1.bf16.msra.mxu0 %v1821
    %2305 = vmatprep.subr.bf16.mxu0 %v1829
    %2306 = vmatpush1.bf16.msra.mxu0 %v1828
    %2307 = vmatprep.subr.bf16.mxu0 %v1836
    %2308 = vmatpush1.bf16.msra.mxu0 %v1835
    %2309 = vmatprep.subr.bf16.mxu0 %v1843
    %2310 = vmatpush1.bf16.msra.mxu0 %v1842
    %2311 = vmatprep.subr.bf16.mxu0 %v1850
    %2312 = vmatpush1.bf16.msra.mxu0 %v1849
    %2313 = vmatprep.subr.bf16.mxu0 %v1857
    %2314 = vmatpush1.bf16.msra.mxu0 %v1856
    %2315 = vmatprep.mubr.bf16.mxu0 %v749
    %2316 = vmatmul.mubr.bf16.gmra.mrb[0].mxu0 %v748
    %v2317 = vpop.f32.mrb[0].mxu0
    %v2318 = vadd.f32 %v1021, %v2317
    %v2319 = vpop.f32.mrb[0].mxu0
    %v2320 = vadd.f32 %v1025, %v2319
    %v2321 = vpop.f32.mrb[0].mxu0
    %v2322 = vadd.f32 %v1021, %v2321
    %v2323 = vpop.f32.mrb[0].mxu0
    %v2324 = vadd.f32 %v1025, %v2323
    %2325 = vdwg.mxu0
    %2326 = vmatprep.subr.bf16.mxu0 %v1864
    %2327 = vmatpush1.bf16.msra.mxu0 %v1863
    %2328 = vmatprep.subr.bf16.mxu0 %v1871
    %2329 = vmatpush1.bf16.msra.mxu0 %v1870
    %2330 = vmatprep.subr.bf16.mxu0 %v1878
    %2331 = vmatpush1.bf16.msra.mxu0 %v1877
    %2332 = vmatprep.subr.bf16.mxu0 %v1885
    %2333 = vmatpush1.bf16.msra.mxu0 %v1884
    %2334 = vmatprep.subr.bf16.mxu0 %v1892
    %2335 = vmatpush1.bf16.msra.mxu0 %v1891
    %2336 = vmatprep.subr.bf16.mxu0 %v1899
    %2337 = vmatpush1.bf16.msra.mxu0 %v1898
    %2338 = vmatprep.subr.bf16.mxu0 %v1906
    %2339 = vmatpush1.bf16.msra.mxu0 %v1905
    %2340 = vmatprep.subr.bf16.mxu0 %v1913
    %2341 = vmatpush1.bf16.msra.mxu0 %v1912
    %2342 = vmatprep.subr.bf16.mxu0 %v1920
    %2343 = vmatpush1.bf16.msra.mxu0 %v1919
    %2344 = vmatprep.subr.bf16.mxu0 %v1927
    %2345 = vmatpush1.bf16.msra.mxu0 %v1926
    %2346 = vmatprep.subr.bf16.mxu0 %v1934
    %2347 = vmatpush1.bf16.msra.mxu0 %v1933
    %2348 = vmatprep.subr.bf16.mxu0 %v1941
    %2349 = vmatpush1.bf16.msra.mxu0 %v1940
    %2350 = vmatprep.subr.bf16.mxu0 %v1948
    %2351 = vmatpush1.bf16.msra.mxu0 %v1947
    %2352 = vmatprep.subr.bf16.mxu0 %v1955
    %2353 = vmatpush1.bf16.msra.mxu0 %v1954
    %2354 = vmatprep.subr.bf16.mxu0 %v1962
    %2355 = vmatpush1.bf16.msra.mxu0 %v1961
    %2356 = vmatprep.subr.bf16.mxu0 %v1969
    %2357 = vmatpush1.bf16.msra.mxu0 %v1968
    %2358 = vmatprep.mubr.bf16.mxu0 %v751
    %2359 = vmatmul.mubr.bf16.gmra.mrb[0].mxu0 %v750
    %v2360 = vpop.f32.mrb[0].mxu0
    %v2361 = vadd.f32 %v2318, %v2360
    %v2362 = vpop.f32.mrb[0].mxu0
    %v2363 = vadd.f32 %v2320, %v2362
    %v2364 = vpop.f32.mrb[0].mxu0
    %v2365 = vadd.f32 %v2322, %v2364
    %v2366 = vpop.f32.mrb[0].mxu0
    %v2367 = vadd.f32 %v2324, %v2366
    %2368 = vdwg.mxu0
    %2369 = vmatprep.subr.bf16.mxu0 %v1754
    %2370 = vmatpush1.bf16.msra.mxu0 %v1753
    %2371 = vmatprep.subr.bf16.mxu0 %v1761
    %2372 = vmatpush1.bf16.msra.mxu0 %v1760
    %2373 = vmatprep.subr.bf16.mxu0 %v1768
    %2374 = vmatpush1.bf16.msra.mxu0 %v1767
    %2375 = vmatprep.subr.bf16.mxu0 %v1775
    %2376 = vmatpush1.bf16.msra.mxu0 %v1774
    %2377 = vmatprep.subr.bf16.mxu0 %v1782
    %2378 = vmatpush1.bf16.msra.mxu0 %v1781
    %2379 = vmatprep.subr.bf16.mxu0 %v1789
    %2380 = vmatpush1.bf16.msra.mxu0 %v1788
    %2381 = vmatprep.subr.bf16.mxu0 %v1796
    %2382 = vmatpush1.bf16.msra.mxu0 %v1795
    %2383 = vmatprep.subr.bf16.mxu0 %v1803
    %2384 = vmatpush1.bf16.msra.mxu0 %v1802
    %2385 = vmatprep.subr.bf16.mxu0 %v1810
    %2386 = vmatpush1.bf16.msra.mxu0 %v1809
    %2387 = vmatprep.subr.bf16.mxu0 %v1817
    %2388 = vmatpush1.bf16.msra.mxu0 %v1816
    %2389 = vmatprep.subr.bf16.mxu0 %v1824
    %2390 = vmatpush1.bf16.msra.mxu0 %v1823
    %2391 = vmatprep.subr.bf16.mxu0 %v1831
    %2392 = vmatpush1.bf16.msra.mxu0 %v1830
    %2393 = vmatprep.subr.bf16.mxu0 %v1838
    %2394 = vmatpush1.bf16.msra.mxu0 %v1837
    %2395 = vmatprep.subr.bf16.mxu0 %v1845
    %2396 = vmatpush1.bf16.msra.mxu0 %v1844
    %2397 = vmatprep.subr.bf16.mxu0 %v1852
    %2398 = vmatpush1.bf16.msra.mxu0 %v1851
    %2399 = vmatprep.subr.bf16.mxu0 %v1859
    %2400 = vmatpush1.bf16.msra.mxu0 %v1858
    %2401 = vmatprep.mubr.bf16.mxu0 %v749
    %2402 = vmatmul.mubr.bf16.gmra.mrb[0].mxu0 %v748
    %v2403 = vpop.f32.mrb[0].mxu0
    %v2404 = vadd.f32 %v1029, %v2403
    %v2405 = vpop.f32.mrb[0].mxu0
    %v2406 = vadd.f32 %v1033, %v2405
    %v2407 = vpop.f32.mrb[0].mxu0
    %v2408 = vadd.f32 %v1029, %v2407
    %v2409 = vpop.f32.mrb[0].mxu0
    %v2410 = vadd.f32 %v1033, %v2409
    %2411 = vdwg.mxu0
    %2412 = vmatprep.subr.bf16.mxu0 %v1866
    %2413 = vmatpush1.bf16.msra.mxu0 %v1865
    %2414 = vmatprep.subr.bf16.mxu0 %v1873
    %2415 = vmatpush1.bf16.msra.mxu0 %v1872
    %2416 = vmatprep.subr.bf16.mxu0 %v1880
    %2417 = vmatpush1.bf16.msra.mxu0 %v1879
    %2418 = vmatprep.subr.bf16.mxu0 %v1887
    %2419 = vmatpush1.bf16.msra.mxu0 %v1886
    %2420 = vmatprep.subr.bf16.mxu0 %v1894
    %2421 = vmatpush1.bf16.msra.mxu0 %v1893
    %2422 = vmatprep.subr.bf16.mxu0 %v1901
    %2423 = vmatpush1.bf16.msra.mxu0 %v1900
    %2424 = vmatprep.subr.bf16.mxu0 %v1908
    %2425 = vmatpush1.bf16.msra.mxu0 %v1907
    %2426 = vmatprep.subr.bf16.mxu0 %v1915
    %2427 = vmatpush1.bf16.msra.mxu0 %v1914
    %2428 = vmatprep.subr.bf16.mxu0 %v1922
    %2429 = vmatpush1.bf16.msra.mxu0 %v1921
    %2430 = vmatprep.subr.bf16.mxu0 %v1929
    %2431 = vmatpush1.bf16.msra.mxu0 %v1928
    %2432 = vmatprep.subr.bf16.mxu0 %v1936
    %2433 = vmatpush1.bf16.msra.mxu0 %v1935
    %2434 = vmatprep.subr.bf16.mxu0 %v1943
    %2435 = vmatpush1.bf16.msra.mxu0 %v1942
    %2436 = vmatprep.subr.bf16.mxu0 %v1950
    %2437 = vmatpush1.bf16.msra.mxu0 %v1949
    %2438 = vmatprep.subr.bf16.mxu0 %v1957
    %2439 = vmatpush1.bf16.msra.mxu0 %v1956
    %2440 = vmatprep.subr.bf16.mxu0 %v1964
    %2441 = vmatpush1.bf16.msra.mxu0 %v1963
    %2442 = vmatprep.subr.bf16.mxu0 %v1971
    %2443 = vmatpush1.bf16.msra.mxu0 %v1970
    %2444 = vmatprep.mubr.bf16.mxu0 %v751
    %2445 = vmatmul.mubr.bf16.gmra.mrb[0].mxu0 %v750
    %v2446 = vpop.f32.mrb[0].mxu0
    %v2447 = vadd.f32 %v2404, %v2446
    %v2448 = vpop.f32.mrb[0].mxu0
    %v2449 = vadd.f32 %v2406, %v2448
    %v2450 = vpop.f32.mrb[0].mxu0
    %v2451 = vadd.f32 %v2408, %v2450
    %v2452 = vpop.f32.mrb[0].mxu0
    %v2453 = vadd.f32 %v2410, %v2452
    %2454 = vdwg.mxu0
    %2455 = vmatprep.subr.bf16.mxu0 0
    %2456 = vmatpush1.bf16.msra.mxu0 %v1755
    %2457 = vmatprep.subr.bf16.mxu0 0
    %2458 = vmatpush1.bf16.msra.mxu0 %v1762
    %2459 = vmatprep.subr.bf16.mxu0 0
    %2460 = vmatpush1.bf16.msra.mxu0 %v1769
    %2461 = vmatprep.subr.bf16.mxu0 0
    %2462 = vmatpush1.bf16.msra.mxu0 %v1776
    %2463 = vmatprep.subr.bf16.mxu0 0
    %2464 = vmatpush1.bf16.msra.mxu0 %v1783
    %2465 = vmatprep.subr.bf16.mxu0 0
    %2466 = vmatpush1.bf16.msra.mxu0 %v1790
    %2467 = vmatprep.subr.bf16.mxu0 0
    %2468 = vmatpush1.bf16.msra.mxu0 %v1797
    %2469 = vmatprep.subr.bf16.mxu0 0
    %2470 = vmatpush1.bf16.msra.mxu0 %v1804
    %2471 = vmatprep.subr.bf16.mxu0 0
    %2472 = vmatpush1.bf16.msra.mxu0 %v1811
    %2473 = vmatprep.subr.bf16.mxu0 0
    %2474 = vmatpush1.bf16.msra.mxu0 %v1818
    %2475 = vmatprep.subr.bf16.mxu0 0
    %2476 = vmatpush1.bf16.msra.mxu0 %v1825
    %2477 = vmatprep.subr.bf16.mxu0 0
    %2478 = vmatpush1.bf16.msra.mxu0 %v1832
    %2479 = vmatprep.subr.bf16.mxu0 0
    %2480 = vmatpush1.bf16.msra.mxu0 %v1839
    %2481 = vmatprep.subr.bf16.mxu0 0
    %2482 = vmatpush1.bf16.msra.mxu0 %v1846
    %2483 = vmatprep.subr.bf16.mxu0 0
    %2484 = vmatpush1.bf16.msra.mxu0 %v1853
    %2485 = vmatprep.subr.bf16.mxu0 0
    %2486 = vmatpush1.bf16.msra.mxu0 %v1860
    %2487 = vmatprep.mubr.bf16.mxu0 %v749
    %2488 = vmatmul.mubr.bf16.gmra.mrb[0].mxu0 %v748
    %v2489 = vpop.f32.mrb[0].mxu0
    %v2490 = vadd.f32 %v1037, %v2489
    %v2491 = vpop.f32.mrb[0].mxu0
    %v2492 = vpop.f32.mrb[0].mxu0
    %v2493 = vadd.f32 %v1037, %v2492
    %v2494 = vpop.f32.mrb[0].mxu0
    %2495 = vdwg.mxu0
    %2496 = vmatprep.subr.bf16.mxu0 0
    %2497 = vmatpush1.bf16.msra.mxu0 %v1867
    %2498 = vmatprep.subr.bf16.mxu0 0
    %2499 = vmatpush1.bf16.msra.mxu0 %v1874
    %2500 = vmatprep.subr.bf16.mxu0 0
    %2501 = vmatpush1.bf16.msra.mxu0 %v1881
    %2502 = vmatprep.subr.bf16.mxu0 0
    %2503 = vmatpush1.bf16.msra.mxu0 %v1888
    %2504 = vmatprep.subr.bf16.mxu0 0
    %2505 = vmatpush1.bf16.msra.mxu0 %v1895
    %2506 = vmatprep.subr.bf16.mxu0 0
    %2507 = vmatpush1.bf16.msra.mxu0 %v1902
    %2508 = vmatprep.subr.bf16.mxu0 0
    %2509 = vmatpush1.bf16.msra.mxu0 %v1909
    %2510 = vmatprep.subr.bf16.mxu0 0
    %2511 = vmatpush1.bf16.msra.mxu0 %v1916
    %2512 = vmatprep.subr.bf16.mxu0 0
    %2513 = vmatpush1.bf16.msra.mxu0 %v1923
    %2514 = vmatprep.subr.bf16.mxu0 0
    %2515 = vmatpush1.bf16.msra.mxu0 %v1930
    %2516 = vmatprep.subr.bf16.mxu0 0
    %2517 = vmatpush1.bf16.msra.mxu0 %v1937
    %2518 = vmatprep.subr.bf16.mxu0 0
    %2519 = vmatpush1.bf16.msra.mxu0 %v1944
    %2520 = vmatprep.subr.bf16.mxu0 0
    %2521 = vmatpush1.bf16.msra.mxu0 %v1951
    %2522 = vmatprep.subr.bf16.mxu0 0
    %2523 = vmatpush1.bf16.msra.mxu0 %v1958
    %2524 = vmatprep.subr.bf16.mxu0 0
    %2525 = vmatpush1.bf16.msra.mxu0 %v1965
    %2526 = vmatprep.subr.bf16.mxu0 0
    %2527 = vmatpush1.bf16.msra.mxu0 %v1972
    %2528 = vmatprep.mubr.bf16.mxu0 %v751
    %2529 = vmatmul.mubr.bf16.gmra.mrb[0].mxu0 %v750
    %v2530 = vpop.f32.mrb[0].mxu0
    %v2531 = vadd.f32 %v2490, %v2530
    %v2532 = vpop.f32.mrb[0].mxu0
    %v2533 = vpop.f32.mrb[0].mxu0
    %v2534 = vadd.f32 %v2493, %v2533
    %v2535 = vpop.f32.mrb[0].mxu0
    %2536 = vdwg.mxu0
    %v2537 = vtanh.pop %v2275
    %v2538 = vtanh.pop %v2277
    %v2539 = vtanh.pop %v2361
    %v2540 = vtanh.pop %v2363
    %v2541 = vtanh.pop %v2447
    %v2542 = vtanh.pop %v2449
    %v2543 = vtanh.pop %v2531
    %v2544 = vtanh.pop %v2279
    %v2545 = vtanh.pop %v2281
    %v2546 = vtanh.pop %v2365
    %v2547 = vtanh.pop %v2367
    %v2548 = vtanh.pop %v2451
    %v2549 = vtanh.pop %v2453
    %v2550 = vtanh.pop %v2534
    %v2551 = vpack.c.bf16 %v2544, %v2537
    %v2552 = vpack.c.bf16 %v2545, %v2538
    %v2553 = vpack.c.bf16 %v2546, %v2539
    %v2554 = vpack.c.bf16 %v2547, %v2540
    %v2555 = vpack.c.bf16 %v2548, %v2541
    %v2556 = vpack.c.bf16 %v2549, %v2542
    %v2557 = vpack.c.bf16 %v2550, %v2543
    %v2565 = vunpack.c.l.b16 %v2551
    %v2566 = vunpack.c.l.b16 %v2552
    %v2567 = vunpack.c.l.b16 %v2553
    %v2568 = vunpack.c.l.b16 %v2554
    %v2569 = vunpack.c.l.b16 %v2555
    %v2570 = vunpack.c.l.b16 %v2556
    %v2571 = vunpack.c.l.b16 %v2557
    %v2572 = vunpack.c.h.b16 %v2551
    %v2573 = vunpack.c.h.b16 %v2552
    %v2574 = vunpack.c.h.b16 %v2553
    %v2575 = vunpack.c.h.b16 %v2554
    %v2576 = vunpack.c.h.b16 %v2555
    %v2577 = vunpack.c.h.b16 %v2556
    %v2578 = vunpack.c.h.b16 %v2557
    %v2579 = vpack.c.b16 %v2566, %v2565
    %v2580 = vpack.c.b16 %v2568, %v2567
    %v2581 = vpack.c.b16 %v2570, %v2569
    %v2582 = vpack.c.b16 %v2571, %v2571
    %v2583 = vpack.c.b16 %v2573, %v2572
    %v2584 = vpack.c.b16 %v2575, %v2574
    %v2585 = vpack.c.b16 %v2577, %v2576
    %v2586 = vpack.c.b16 %v2578, %v2578
    %2595 = vst [vmem:[#allocation10] sm:$0xff] %v2579
    %2596 = vst [vmem:[#allocation10 + $0x8] sm:$0xff] %v2580
    %2597 = vst [vmem:[#allocation10 + $0x10] sm:$0xff] %v2581
    %vm2598 = vcmask 125952
    %2599 = vst.msk [vmem:[#allocation10 + $0x18] sm:$0xf] %vm2598, %v2582
    %2600 = vst [vmem:[#allocation10 + $0x1c] sm:$0xff] %v2583
    %2601 = vst [vmem:[#allocation10 + $0x24] sm:$0xff] %v2584
    %2602 = vst [vmem:[#allocation10 + $0x2c] sm:$0xff] %v2585
    %2603 = vst.msk [vmem:[#allocation10 + $0x34] sm:$0xf] %vm2598, %v2586
    // Predicated region
    $region46: #{tpu_custom_call.1} parent=1 // pred_check
      _
    $region47: #{tpu_custom_call.1} parent=1 // pred_check_branch
      %2605 = sbr.rel (0) target = $region49
    $region48: #{tpu_custom_call.1} parent=1 // pred_region
      %s2607 = ssub.s32 896, 896
      %2608 = vsyncadd [#allocation4], %s2607
      %s2609 = sshll.u32 [#allocation10], 4
      %s2610 = int_to_ptr.vmem [resolvable:$true] %s2609
      %2615 = dma.vmem_to_hbm [thread:$0]  %s2610, 896, %s7, [#allocation4], 448, 448, 28
    $region49: #{tpu_custom_call.1} parent=1 // pred_fallthru
      _
    // Predicated region
    $region50: #{tpu_custom_call.1} parent=1 // pred_check
      _
    $region51: #{tpu_custom_call.1} parent=1 // pred_check_branch
      %2617 = sbr.rel (0) target = $region53
    $region52: #{tpu_custom_call.1} parent=1 // pred_region
      %2618 = dma.done [#allocation4], 896
    $region53: #{tpu_custom_call.1} parent=1 // pred_fallthru
      _
    %2619 = vsyncpa [#allocation3], 1
    %2620 = vsyncpa [#allocation6], 1
    %2621 = vsyncpa [#allocation9], 1
    %2622 = vsyncpa [#allocation4], 1

</llo_original>
